<compile_context>
chip_gen: v5e
topology: v5e:2x2
jax: 0.10.0
libtpu: 0.0.40
codegen_flags: <defaults>
</compile_context>

<pallas_src>
import functools

import numpy as np
import jax
import jax.numpy as jnp
from jax.experimental import pallas as pl
from jax.experimental.pallas import tpu as pltpu

# 1-D 5-tap Gaussian [1,4,6,4,1]/16; the 5x5 kernel of the PyTorch module is
# its outer product (/256 total).  Symmetric taps, split by parity for the
# fused blur + ::2 decimation (polyphase) formulation.
_KE0 = 1.0 / 16.0   # taps 0 and 4 (even phase, outer)
_KE1 = 6.0 / 16.0   # tap 2        (even phase, center)
_KO = 4.0 / 16.0    # taps 1 and 3 (odd phase)

_LANES = 128
_L1_TILE_ROWS = 2048          # 2048x128xf32 = 1 MiB blocks (~roofline)
_MIN_PALLAS_WO = 64           # prdown: XLA fallback when decimated width < 64
_MIN_PALLAS_HO = 8
_MIN_PALLAS_L1 = 32 * 1024    # elements: below this, L1 in plain JAX


def _round_up(x, m):
    return ((x + m - 1) // m) * m


@functools.lru_cache(maxsize=None)
def _vmem_limit_bytes():
    """Derive a safe scoped-VMEM limit from the actual chip (v7x has 64 MiB)."""
    cap = 64 * 1024 * 1024           # conservative default = v7x physical VMEM
    try:
        cap = int(pltpu.get_tpu_info().vmem_capacity_bytes)
    except Exception:
        pass
    # ~25% headroom for double buffers + Mosaic internal scratch.
    return int(min(max(cap - cap // 4, 32 * 1024 * 1024), 112 * 1024 * 1024))


def _block_budget_bytes():
    # Per-grid-step block-set budget; /6 covers the 2x double-buffer factor
    # with extra slack (=> ~8 MiB on v7x, ~16 MiB on v5e/v6e).
    return _vmem_limit_bytes() // 6


def _pick_tb(n_planes, per_plane_bytes, budget):
    """Largest divisor of n_planes fitting the budget, keeping grid >= 2."""
    tb = max(1, min(n_planes, budget // max(per_plane_bytes, 1)))
    if n_planes >= 2:
        tb = max(1, min(tb, n_planes // 2))   # grid >= 2: both v7x TensorCores
    while n_planes % tb:
        tb -= 1
    return tb


# ---------------------------------------------------------------------------
# Pallas kernel 1: fused separable 5x5 Gaussian blur + ::2 decimation (Prdown)
# ---------------------------------------------------------------------------
def _prdown_kernel(c_ref, o_ref):
    """Separable 5x5 Gaussian blur fused with the ::2 subsample.

    c_ref holds the 4 polyphase components of the zero-padded plane, stacked
    on the leading axis in order [(0,0), (0,1), (1,0), (1,1)]:
        c_ref[2*p + q, t, m, n] == zero_pad(x, 2)[t, 2*m + p, 2*n + q]
    so the kernel only ever computes and writes the decimated (Ho, Wo) output.
    Whole-block ops (no per-plane loop), symmetric-tap factoring.
    """
    _, _, Hp, Wp = c_ref.shape
    Ho, Wo = Hp - 2, Wp - 2

    def v_even(ph):   # vertical taps k0, k2, k4 of phase `ph`
        return (_KE0 * (c_ref[ph, :, 0:Ho, :] + c_ref[ph, :, 2:Ho + 2, :])
                + _KE1 * c_ref[ph, :, 1:Ho + 1, :])

    def v_odd(ph):    # vertical taps k1, k3
        return _KO * (c_ref[ph, :, 0:Ho, :] + c_ref[ph, :, 1:Ho + 1, :])

    def h_even(v):    # horizontal taps k0, k2, k4
        return (_KE0 * (v[:, :, 0:Wo] + v[:, :, 2:Wo + 2])
                + _KE1 * v[:, :, 1:Wo + 1])

    def h_odd(v):     # horizontal taps k1, k3
        return _KO * (v[:, :, 0:Wo] + v[:, :, 1:Wo + 1])

    acc = (h_even(v_even(0)) + h_odd(v_even(1))
           + h_even(v_odd(2)) + h_odd(v_odd(3)))
    o_ref[...] = acc.astype(o_ref.dtype)


def _prdown_pallas(x):
    """Prdown (5x5 Gaussian blur, padding=2, then ::2) for (B, C, H, W) f32."""
    B, C, H, W = x.shape
    N = B * C
    Ho, Wo = (H + 1) // 2, (W + 1) // 2
    Hp, Wp = Ho + 2, Wo + 2
    xf = x.reshape(N, H, W).astype(jnp.float32)

    # Single stacked polyphase array built in one XLA fusion: one BlockSpec /
    # one DMA stream per grid step (instead of four separate inputs).
    # TODO(synk): fully fuse this split into the kernel with strided DMAs from
    # an ANY-space input to drop the remaining extra HBM pass.
    xp = jnp.pad(xf, ((0, 0), (2, 2), (2, 2)))

    def comp(p, q):
        c = xp[:, p::2, q::2]
        return jnp.pad(c, ((0, 0),
                           (0, Hp - c.shape[1]),
                           (0, Wp - c.shape[2])))

    comps = jnp.stack([comp(0, 0), comp(0, 1), comp(1, 0), comp(1, 1)], axis=0)

    per_plane_bytes = 4 * (4 * Hp * Wp + Ho * Wo)
    tb = _pick_tb(N, per_plane_bytes, _block_budget_bytes())

    out = pl.pallas_call(
        _prdown_kernel,
        out_shape=jax.ShapeDtypeStruct((N, Ho, Wo), jnp.float32),
        grid=(N // tb,),
        in_specs=[pl.BlockSpec((4, tb, Hp, Wp), lambda i: (0, i, 0, 0))],
        out_specs=pl.BlockSpec((tb, Ho, Wo), lambda i: (i, 0, 0)),
        compiler_params=pltpu.CompilerParams(
            dimension_semantics=("parallel",),
            vmem_limit_bytes=_vmem_limit_bytes()),
    )(comps)
    return out.reshape(B, C, Ho, Wo)


def _prdown_jax(x):
    """Exact same math in plain JAX (tiny levels / oversized planes / ref)."""
    B, C, H, W = x.shape
    k = [1.0 / 16, 4.0 / 16, 6.0 / 16, 4.0 / 16, 1.0 / 16]
    xp = jnp.pad(x.astype(jnp.float32), ((0, 0), (0, 0), (2, 2), (2, 2)))
    v = k[0] * xp[:, :, 0:H, :]
    for d in range(1, 5):
        v = v + k[d] * xp[:, :, d:d + H, :]
    o = k[0] * v[:, :, :, 0:W]
    for d in range(1, 5):
        o = o + k[d] * v[:, :, :, d:d + W]
    return o[:, :, ::2, ::2]


def prdown(x):
    """Gaussian_pyramid.Prdown: 5x5 Gaussian blur (padding=2) then ::2."""
    H, W = x.shape[-2], x.shape[-1]
    Ho, Wo = (H + 1) // 2, (W + 1) // 2
    if Ho < _MIN_PALLAS_HO or Wo < _MIN_PALLAS_WO:
        # deep/narrow pyramid level: masked (<50% lane) stores + launch cost
        return _prdown_jax(x)
    per_plane_bytes = 4 * (4 * (Ho + 2) * (Wo + 2) + Ho * Wo)
    if per_plane_bytes > _block_budget_bytes():
        # TODO(synk): row-tile huge planes (2-row halo) instead of XLA fallback.
        return _prdown_jax(x)
    return _prdown_pallas(x)


def gaussian_pyramid(x, step=5):
    """Gaussian_pyramid.forward: list of pyramid levels."""
    levels = [x]
    for _ in range(step - 1):
        levels.append(prdown(levels[-1]))
    return levels


# ---------------------------------------------------------------------------
# Pallas kernel 2: L1 loss (mean |a - b|), lane-dense, tiled & pipelined
# ---------------------------------------------------------------------------
def _l1_sum_kernel(a_ref, b_ref, o_ref, acc_ref, *, rows_total):
    i = pl.program_id(0)
    tr = a_ref.shape[0]

    @pl.when(i == 0)
    def _():
        acc_ref[...] = jnp.zeros_like(acc_ref)

    d = jnp.abs(a_ref[...] - b_ref[...])
    # Mask rows past the end of the array (last, possibly partial, block).
    row = jax.lax.broadcasted_iota(jnp.int32, d.shape, 0) + i * tr
    acc_ref[...] += jnp.where(row < rows_total, d, 0.0)

    @pl.when(i == pl.num_programs(0) - 1)
    def _():
        o_ref[0, 0] = jnp.sum(acc_ref[...])


def l1_mean(a, b):
    """nn.L1Loss(reduction='mean') between equally shaped arrays."""
    assert a.shape == b.shape
    n = int(np.prod(a.shape))
    if n < _MIN_PALLAS_L1:
        # tiny deep-pyramid level: cheaper in XLA than a separate pallas_call
        return jnp.mean(jnp.abs(a.astype(jnp.float32) - b.astype(jnp.float32)))

    rows = n // _LANES
    main = rows * _LANES
    af = a.reshape(-1).astype(jnp.float32)
    bf = b.reshape(-1).astype(jnp.float32)
    if main == n:
        # hot path: pure reshape, no padding / no extra HBM pass
        a2 = af.reshape(rows, _LANES)
        b2 = bf.reshape(rows, _LANES)
        tail = None
    else:
        # ragged tail (< 128 elems): prefix goes to Pallas, tail to XLA
        a2 = af[:main].reshape(rows, _LANES)
        b2 = bf[:main].reshape(rows, _LANES)
        tail = (af[main:], bf[main:])

    tr = min(_L1_TILE_ROWS, _round_up(rows, 8))
    kern = functools.partial(_l1_sum_kernel, rows_total=rows)
    s = pl.pallas_call(
        kern,
        out_shape=jax.ShapeDtypeStruct((1, 1), jnp.float32),
        grid=(pl.cdiv(rows, tr),),
        in_specs=[pl.BlockSpec((tr, _LANES), lambda i: (i, 0)),
                  pl.BlockSpec((tr, _LANES), lambda i: (i, 0))],
        out_specs=pl.BlockSpec(memory_space=pltpu.MemorySpace.SMEM),
        scratch_shapes=[pltpu.VMEM((tr, _LANES), jnp.float32)],
        compiler_params=pltpu.CompilerParams(
            dimension_semantics=("arbitrary",),
            vmem_limit_bytes=_vmem_limit_bytes()),
    )(a2, b2)
    # TODO(synk): on v7x, split the reduction over a leading "parallel" axis
    # (per-core partial sums) to use both TensorCores.
    total = s[0, 0]
    if tail is not None:
        total = total + jnp.sum(jnp.abs(tail[0] - tail[1]))
    return total / jnp.float32(n)


# ---------------------------------------------------------------------------
# Guided filter (plain-JAX glue, gather-free boxfilter)
# ---------------------------------------------------------------------------
def _boxfilter_1d(x, r, axis):
    axis = axis % x.ndim
    n = x.shape[axis]
    pad_cfg = [(0, 0)] * x.ndim
    pad_cfg[axis] = (r, r)
    xp = jnp.pad(x, pad_cfg)
    c = jnp.cumsum(xp, axis=axis)
    zero = jnp.zeros_like(jax.lax.slice_in_dim(c, 0, 1, axis=axis))
    cz = jnp.concatenate([zero, c], axis=axis)        # cz[k] = sum xp[0:k]
    hi = jax.lax.slice_in_dim(cz, 2 * r + 1, 2 * r + 1 + n, axis=axis)
    lo = jax.lax.slice_in_dim(cz, 0, n, axis=axis)
    return hi - lo                                    # clamped window sums


def boxfilter(x, r):
    return _boxfilter_1d(_boxfilter_1d(x, r, -2), r, -1)


def guidedfilter(I, r=11, eps=0.01):
    # TODO(synk): `guidedfilter` is referenced but not defined in the provided
    # PyTorch source; this is the canonical self-guided (He et al.) filter,
    # per channel, kept as plain-JAX glue (not the Pallas hot path).
    I = I.astype(jnp.float32)
    N = boxfilter(jnp.ones_like(I), r)
    mean_I = boxfilter(I, r) / N
    mean_II = boxfilter(I * I, r) / N
    var_I = mean_II - mean_I * mean_I
    a = var_I / (var_I + eps)
    b = mean_I - a * mean_I
    mean_a = boxfilter(a, r) / N
    mean_b = boxfilter(b, r) / N
    return mean_a * I + mean_b


# ---------------------------------------------------------------------------
# Gau_pyr_loss.forward (multi_channel=True, loss_mode='L1Loss')
# ---------------------------------------------------------------------------
def gau_pyr_loss(x1L, step=5):
    weights = [1.0 / 2 ** (step - i) for i in range(1, step + 1)]
    cur = len(x1L) // 2
    x = guidedfilter(x1L[cur], r=11, eps=0.01)
    x_gau = gaussian_pyramid(x, step=step)
    loss = jnp.float32(0.0)
    # TODO(synk): batch the per-level L1 reductions across images (one kernel
    # per level with per-segment weights) to remove ~(n_imgs*step) launches.
    for i in range(len(x1L)):
        if i == cur:
            continue
        x1 = guidedfilter(x1L[i], r=11, eps=0.01)
        x1_gau = gaussian_pyramid(x1, step=step)
        for j in range(len(x1_gau)):
            # NOTE: weights indexed by image i (faithful to the PyTorch code)
            loss = loss + weights[i] * l1_mean(x1_gau[j], x_gau[j])
    return loss


if __name__ == "__main__":
    key = jax.random.PRNGKey(0)
    B, C, H, W = 2, 3, 128, 128          # multi_channel=True => 3 channels
    n_imgs = 3                            # len(x1L) <= step (weights indexing)
    keys = jax.random.split(key, n_imgs + 2)
    x1L = [jax.random.uniform(keys[i], (B, C, H, W), dtype=jnp.float32)
           for i in range(n_imgs)]

    # Check 1: Pallas fused blur+decimate vs exact-f32 JAX reference and vs the
    # PyTorch-equivalent depthwise 5x5 conv (padding=2) followed by ::2.
    xchk = x1L[0]
    got = jax.block_until_ready(_prdown_pallas(xchk))
    ref_exact = _prdown_jax(xchk)
    assert got.shape == ref_exact.shape
    assert float(jnp.max(jnp.abs(got - ref_exact))) < 1e-5

    g2d = np.outer([1.0, 4.0, 6.0, 4.0, 1.0], [1.0, 4.0, 6.0, 4.0, 1.0]) / 256.0
    wts = jnp.tile(jnp.asarray(g2d, jnp.float32)[None, None], (C, 1, 1, 1))
    ref_conv = jax.lax.conv_general_dilated(
        xchk, wts, (1, 1), ((2, 2), (2, 2)),
        dimension_numbers=("NCHW", "OIHW", "NCHW"),
        feature_group_count=C,
        precision=jax.lax.Precision.HIGHEST)[:, :, ::2, ::2]
    assert float(jnp.max(jnp.abs(got - ref_conv))) < 1e-3

    # Check 2: Pallas L1 on a non-multiple-of-128 size (exercises the in-kernel
    # row mask for the partial last block and the ragged JAX tail).
    a = jax.random.uniform(keys[n_imgs], (2, 3, 77, 101), dtype=jnp.float32)
    b = jax.random.uniform(keys[n_imgs + 1], (2, 3, 77, 101), dtype=jnp.float32)
    got_l1 = jax.block_until_ready(l1_mean(a, b))
    ref_l1 = jnp.mean(jnp.abs(a - b))
    assert abs(float(got_l1) - float(ref_l1)) < 1e-5

    # Full loss.
    loss_fn = jax.jit(functools.partial(gau_pyr_loss, step=5))
    loss = jax.block_until_ready(loss_fn(x1L))
    assert bool(jnp.isfinite(loss))
    print("KERNEL_OK")
</pallas_src>

<mosaic_0001>
module attributes {stable_mosaic.version = 11 : i64} {
  func.func @_prdown_kernel(%arg0: i32, %arg1: memref<4x3x66x66xf32, #tpu.memory_space<vmem>>, %arg2: memref<3x64x64xf32, #tpu.memory_space<vmem>>) attributes {dimension_semantics = [#tpu.dimension_semantics<parallel>], iteration_bounds = array<i64: 2>, scalar_prefetch = 0 : i64, scratch_operands = 0 : i64, tpu.core_type = #tpu.core_type<tc>, window_params = [{transform_indices = @transform_0, window_bounds = array<i64: 4, 3, 66, 66>}, {transform_indices = @transform_1, window_bounds = array<i64: 3, 64, 64>}]} {
    %c0 = arith.constant 0 : index
    %c0_0 = arith.constant 0 : index
    %c0_1 = arith.constant 0 : index
    %c0_2 = arith.constant 0 : index
    %0 = vector.load %arg1[%c0, %c0_0, %c0_1, %c0_2] : memref<4x3x66x66xf32, #tpu.memory_space<vmem>>, vector<1x3x64x66xf32>
    %1 = vector.shape_cast %0 : vector<1x3x64x66xf32> to vector<3x64x66xf32>
    %c0_3 = arith.constant 0 : index
    %c0_4 = arith.constant 0 : index
    %c2 = arith.constant 2 : index
    %c0_5 = arith.constant 0 : index
    %2 = vector.load %arg1[%c0_3, %c0_4, %c2, %c0_5] : memref<4x3x66x66xf32, #tpu.memory_space<vmem>>, vector<1x3x64x66xf32>
    %3 = vector.shape_cast %2 : vector<1x3x64x66xf32> to vector<3x64x66xf32>
    %4 = arith.addf %1, %3 : vector<3x64x66xf32>
    %cst = arith.constant 6.250000e-02 : f32
    %5 = vector.broadcast %cst : f32 to vector<3x64x66xf32>
    %6 = arith.mulf %5, %4 : vector<3x64x66xf32>
    %c0_6 = arith.constant 0 : index
    %c0_7 = arith.constant 0 : index
    %c1 = arith.constant 1 : index
    %c0_8 = arith.constant 0 : index
    %7 = vector.load %arg1[%c0_6, %c0_7, %c1, %c0_8] : memref<4x3x66x66xf32, #tpu.memory_space<vmem>>, vector<1x3x64x66xf32>
    %8 = vector.shape_cast %7 : vector<1x3x64x66xf32> to vector<3x64x66xf32>
    %cst_9 = arith.constant 3.750000e-01 : f32
    %9 = vector.broadcast %cst_9 : f32 to vector<3x64x66xf32>
    %10 = arith.mulf %9, %8 : vector<3x64x66xf32>
    %11 = arith.addf %6, %10 : vector<3x64x66xf32>
    %12 = vector.extract_strided_slice %11 {offsets = [0, 0, 0], sizes = [3, 64, 64], strides = [1, 1, 1]} : vector<3x64x66xf32> to vector<3x64x64xf32>
    %13 = vector.extract_strided_slice %11 {offsets = [0, 0, 2], sizes = [3, 64, 64], strides = [1, 1, 1]} : vector<3x64x66xf32> to vector<3x64x64xf32>
    %14 = arith.addf %12, %13 : vector<3x64x64xf32>
    %cst_10 = arith.constant 6.250000e-02 : f32
    %15 = vector.broadcast %cst_10 : f32 to vector<3x64x64xf32>
    %16 = arith.mulf %15, %14 : vector<3x64x64xf32>
    %17 = vector.extract_strided_slice %11 {offsets = [0, 0, 1], sizes = [3, 64, 64], strides = [1, 1, 1]} : vector<3x64x66xf32> to vector<3x64x64xf32>
    %cst_11 = arith.constant 3.750000e-01 : f32
    %18 = vector.broadcast %cst_11 : f32 to vector<3x64x64xf32>
    %19 = arith.mulf %18, %17 : vector<3x64x64xf32>
    %20 = arith.addf %16, %19 : vector<3x64x64xf32>
    %c1_12 = arith.constant 1 : index
    %c0_13 = arith.constant 0 : index
    %c0_14 = arith.constant 0 : index
    %c0_15 = arith.constant 0 : index
    %21 = vector.load %arg1[%c1_12, %c0_13, %c0_14, %c0_15] : memref<4x3x66x66xf32, #tpu.memory_space<vmem>>, vector<1x3x64x66xf32>
    %22 = vector.shape_cast %21 : vector<1x3x64x66xf32> to vector<3x64x66xf32>
    %c1_16 = arith.constant 1 : index
    %c0_17 = arith.constant 0 : index
    %c2_18 = arith.constant 2 : index
    %c0_19 = arith.constant 0 : index
    %23 = vector.load %arg1[%c1_16, %c0_17, %c2_18, %c0_19] : memref<4x3x66x66xf32, #tpu.memory_space<vmem>>, vector<1x3x64x66xf32>
    %24 = vector.shape_cast %23 : vector<1x3x64x66xf32> to vector<3x64x66xf32>
    %25 = arith.addf %22, %24 : vector<3x64x66xf32>
    %cst_20 = arith.constant 6.250000e-02 : f32
    %26 = vector.broadcast %cst_20 : f32 to vector<3x64x66xf32>
    %27 = arith.mulf %26, %25 : vector<3x64x66xf32>
    %c1_21 = arith.constant 1 : index
    %c0_22 = arith.constant 0 : index
    %c1_23 = arith.constant 1 : index
    %c0_24 = arith.constant 0 : index
    %28 = vector.load %arg1[%c1_21, %c0_22, %c1_23, %c0_24] : memref<4x3x66x66xf32, #tpu.memory_space<vmem>>, vector<1x3x64x66xf32>
    %29 = vector.shape_cast %28 : vector<1x3x64x66xf32> to vector<3x64x66xf32>
    %cst_25 = arith.constant 3.750000e-01 : f32
    %30 = vector.broadcast %cst_25 : f32 to vector<3x64x66xf32>
    %31 = arith.mulf %30, %29 : vector<3x64x66xf32>
    %32 = arith.addf %27, %31 : vector<3x64x66xf32>
    %33 = vector.extract_strided_slice %32 {offsets = [0, 0, 0], sizes = [3, 64, 64], strides = [1, 1, 1]} : vector<3x64x66xf32> to vector<3x64x64xf32>
    %34 = vector.extract_strided_slice %32 {offsets = [0, 0, 1], sizes = [3, 64, 64], strides = [1, 1, 1]} : vector<3x64x66xf32> to vector<3x64x64xf32>
    %35 = arith.addf %33, %34 : vector<3x64x64xf32>
    %cst_26 = arith.constant 2.500000e-01 : f32
    %36 = vector.broadcast %cst_26 : f32 to vector<3x64x64xf32>
    %37 = arith.mulf %36, %35 : vector<3x64x64xf32>
    %38 = arith.addf %20, %37 : vector<3x64x64xf32>
    %c2_27 = arith.constant 2 : index
    %c0_28 = arith.constant 0 : index
    %c0_29 = arith.constant 0 : index
    %c0_30 = arith.constant 0 : index
    %39 = vector.load %arg1[%c2_27, %c0_28, %c0_29, %c0_30] : memref<4x3x66x66xf32, #tpu.memory_space<vmem>>, vector<1x3x64x66xf32>
    %40 = vector.shape_cast %39 : vector<1x3x64x66xf32> to vector<3x64x66xf32>
    %c2_31 = arith.constant 2 : index
    %c0_32 = arith.constant 0 : index
    %c1_33 = arith.constant 1 : index
    %c0_34 = arith.constant 0 : index
    %41 = vector.load %arg1[%c2_31, %c0_32, %c1_33, %c0_34] : memref<4x3x66x66xf32, #tpu.memory_space<vmem>>, vector<1x3x64x66xf32>
    %42 = vector.shape_cast %41 : vector<1x3x64x66xf32> to vector<3x64x66xf32>
    %43 = arith.addf %40, %42 : vector<3x64x66xf32>
    %cst_35 = arith.constant 2.500000e-01 : f32
    %44 = vector.broadcast %cst_35 : f32 to vector<3x64x66xf32>
    %45 = arith.mulf %44, %43 : vector<3x64x66xf32>
    %46 = vector.extract_strided_slice %45 {offsets = [0, 0, 0], sizes = [3, 64, 64], strides = [1, 1, 1]} : vector<3x64x66xf32> to vector<3x64x64xf32>
    %47 = vector.extract_strided_slice %45 {offsets = [0, 0, 2], sizes = [3, 64, 64], strides = [1, 1, 1]} : vector<3x64x66xf32> to vector<3x64x64xf32>
    %48 = arith.addf %46, %47 : vector<3x64x64xf32>
    %cst_36 = arith.constant 6.250000e-02 : f32
    %49 = vector.broadcast %cst_36 : f32 to vector<3x64x64xf32>
    %50 = arith.mulf %49, %48 : vector<3x64x64xf32>
    %51 = vector.extract_strided_slice %45 {offsets = [0, 0, 1], sizes = [3, 64, 64], strides = [1, 1, 1]} : vector<3x64x66xf32> to vector<3x64x64xf32>
    %cst_37 = arith.constant 3.750000e-01 : f32
    %52 = vector.broadcast %cst_37 : f32 to vector<3x64x64xf32>
    %53 = arith.mulf %52, %51 : vector<3x64x64xf32>
    %54 = arith.addf %50, %53 : vector<3x64x64xf32>
    %55 = arith.addf %38, %54 : vector<3x64x64xf32>
    %c3 = arith.constant 3 : index
    %c0_38 = arith.constant 0 : index
    %c0_39 = arith.constant 0 : index
    %c0_40 = arith.constant 0 : index
    %56 = vector.load %arg1[%c3, %c0_38, %c0_39, %c0_40] : memref<4x3x66x66xf32, #tpu.memory_space<vmem>>, vector<1x3x64x66xf32>
    %57 = vector.shape_cast %56 : vector<1x3x64x66xf32> to vector<3x64x66xf32>
    %c3_41 = arith.constant 3 : index
    %c0_42 = arith.constant 0 : index
    %c1_43 = arith.constant 1 : index
    %c0_44 = arith.constant 0 : index
    %58 = vector.load %arg1[%c3_41, %c0_42, %c1_43, %c0_44] : memref<4x3x66x66xf32, #tpu.memory_space<vmem>>, vector<1x3x64x66xf32>
    %59 = vector.shape_cast %58 : vector<1x3x64x66xf32> to vector<3x64x66xf32>
    %60 = arith.addf %57, %59 : vector<3x64x66xf32>
    %cst_45 = arith.constant 2.500000e-01 : f32
    %61 = vector.broadcast %cst_45 : f32 to vector<3x64x66xf32>
    %62 = arith.mulf %61, %60 : vector<3x64x66xf32>
    %63 = vector.extract_strided_slice %62 {offsets = [0, 0, 0], sizes = [3, 64, 64], strides = [1, 1, 1]} : vector<3x64x66xf32> to vector<3x64x64xf32>
    %64 = vector.extract_strided_slice %62 {offsets = [0, 0, 1], sizes = [3, 64, 64], strides = [1, 1, 1]} : vector<3x64x66xf32> to vector<3x64x64xf32>
    %65 = arith.addf %63, %64 : vector<3x64x64xf32>
    %cst_46 = arith.constant 2.500000e-01 : f32
    %66 = vector.broadcast %cst_46 : f32 to vector<3x64x64xf32>
    %67 = arith.mulf %66, %65 : vector<3x64x64xf32>
    %68 = arith.addf %55, %67 : vector<3x64x64xf32>
    %c0_47 = arith.constant 0 : index
    %c0_48 = arith.constant 0 : index
    %c0_49 = arith.constant 0 : index
    %69 = vector.load %arg2[%c0_47, %c0_48, %c0_49] : memref<3x64x64xf32, #tpu.memory_space<vmem>>, vector<3x64x64xf32>
    tpu.vector_store %arg2[%c0_47, %c0_48, %c0_49], %68 {strides = array<i32>} : memref<3x64x64xf32, #tpu.memory_space<vmem>>, vector<3x64x64xf32>,
    return
  }
  func.func @transform_0(%arg0: i32) -> (i32, i32, i32, i32) {
    %c0_i32 = arith.constant 0 : i32
    %c0_i32_0 = arith.constant 0 : i32
    %c0_i32_1 = arith.constant 0 : i32
    %c0_i32_2 = arith.constant 0 : i32
    return %c0_i32, %arg0, %c0_i32_0, %c0_i32_1 : i32, i32, i32, i32
  }
  func.func @transform_1(%arg0: i32) -> (i32, i32, i32) {
    %c0_i32 = arith.constant 0 : i32
    %c0_i32_0 = arith.constant 0 : i32
    %c0_i32_1 = arith.constant 0 : i32
    return %arg0, %c0_i32, %c0_i32_0 : i32, i32, i32
  }
}

</mosaic_0001>

<llo_original>
// kernel: tpu_custom_call.1
$region0: #{tpu_custom_call.1}
  #allocation0 [shape = 'u32[]', space=smem, size = 0x4, offset = 0x4, fixed_abs, tag = 'smem constant byte address 0x4 - core index']
  #allocation1 [shape = 'u32[72,128]{1,0:T(1,128)}', space=vmem, size = 0x9000, scoped, tag = 'internal scratch']
  %s0 = inlined_call_operand.vmem [shape: f32[4,6,66,66], index: 0, kind: input, shape index: {}]
  %s1 = inlined_call_operand.hbm [shape: f32[6,64,64], index: 1, kind: output, shape index: {}]
  %s2 = sld [smem:[#allocation0]]
  $region75: #{tpu_custom_call.1} parent=0
    _
  %s4 = ssub.s32 1, %s2
  %s5 = scalar_select 0, %s4, %s2
  $region1: #{tpu_custom_call.1} parent=0
    #allocation2 [shape = 'u8[884736]{0}', space=vmem, size = 0xd8000, scoped, tag = 'input window, operand 0']
    #allocation3 [shape = 'u8[196608]{0}', space=vmem, size = 0x30000, scoped, tag = 'output window, operand 0']
    #allocation4 [shape = 's32[2]{0}', space=sflag, size = 0x8, scoped, tag = 'scoped memory for tpu_custom_call.1']
    %6 = vsyncpa [#allocation4], 0
    %s7 = scalar_lea.sflag [#allocation4], 1
    %8 = vsyncpa %s7, 0
    loop: start=0, step=1, limit=4
    $region2: #{tpu_custom_call.1} parent=1 // loop_pre_header
      _
    $region3: #{tpu_custom_call.1} parent=1 // loop_header
      %s10 = sphi 0, %s14
      %p11 = scmp.ge.s32.totalorder %s10, 4
      %s20 = sphi 0, %s22
      %s23 = sphi 0, %s20
      %s24 = sphi 0, %s23
      %s40 = sphi 0, %s24
      %s46 = sphi 0, %s48
      %s49 = sphi 0, %s46
      %s50 = sphi 0, %s49
      %s66 = sphi 0, %s50
    $region4: #{tpu_custom_call.1} parent=1 // loop_header_branch
      %13 = sbr.rel (%p11) target = $region8
    $region5: #{tpu_custom_call.1} parent=1 // loop_body
      %s15 = ssub.s32 %s10, 1
      %s16 = ssub.s32 %s10, 2
      %s17 = sadd.s32 %s10, 1
      %s18 = ssub.s32 %s10, %s17
      %p19 = scmp.eq.s32.totalorder %s18, 0
      %s21 = sadd.s32 %s20, 1
      %s22 = scalar_select %p19, %s20, %s21
      %p25 = pneg %p19
      %p26 = scmp.eq.s32.totalorder %s10, 1
      %p27 = por %p25, %p26
      %p28 = scmp.ne.s32.totalorder %s20, %s23
      %p29 = scmp.eq.s32.totalorder %s10, 0
      %p30 = por %p28, %p29
      %p31 = scmp.ne.s32.totalorder %s20, %s23
      %p32 = scmp.eq.s32.totalorder %s15, 1
      %p33 = por %p31, %p32
      %p34 = scmp.ne.s32.totalorder %s23, %s24
      %p35 = scmp.eq.s32.totalorder %s15, 0
      %p36 = por %p34, %p35
      %p37 = scmp.ne.s32.totalorder %s23, %s24
      %p38 = scmp.eq.s32.totalorder %s16, 1
      %p39 = por %p37, %p38
      %p41 = scmp.ne.s32.totalorder %s24, %s40
      %p42 = scmp.eq.s32.totalorder %s16, 0
      %p43 = por %p41, %p42
      %s44 = ssub.s32 %s10, %s17
      %p45 = scmp.eq.s32.totalorder %s44, 0
      %s47 = sadd.s32 %s46, 1
      %s48 = scalar_select %p45, %s46, %s47
      %p51 = pneg %p45
      %p52 = scmp.eq.s32.totalorder %s10, 1
      %p53 = por %p51, %p52
      %p54 = scmp.ne.s32.totalorder %s46, %s49
      %p55 = scmp.eq.s32.totalorder %s10, 0
      %p56 = por %p54, %p55
      %p57 = scmp.ne.s32.totalorder %s46, %s49
      %p58 = scmp.eq.s32.totalorder %s15, 1
      %p59 = por %p57, %p58
      %p60 = scmp.ne.s32.totalorder %s49, %s50
      %p61 = scmp.eq.s32.totalorder %s15, 0
      %p62 = por %p60, %p61
      %p63 = scmp.ne.s32.totalorder %s49, %s50
      %p64 = scmp.eq.s32.totalorder %s16, 1
      %p65 = por %p63, %p64
      %p67 = scmp.ne.s32.totalorder %s50, %s66
      %p68 = scmp.eq.s32.totalorder %s16, 0
      %p69 = por %p67, %p68
      %p70 = scmp.le.s32.totalorder 1, %s10
      %p71 = scmp.lt.s32.totalorder %s10, 3
      %p72 = pnand %p70, %p71
      %p73 = pneg %p72
      // Predicated region
      $region9: #{tpu_custom_call.1} parent=5 // pred_check
        _
      $region10: #{tpu_custom_call.1} parent=5 // pred_check_branch
        %75 = sbr.rel (%p72) target = $region12
      $region11: #{tpu_custom_call.1} parent=5 // pred_region
        %s76 = ssub.s32 %s10, 1
      $region12: #{tpu_custom_call.1} parent=5 // pred_fallthru
        _
      %p77 = scmp.lt.s32.totalorder %s10, 2
      // Predicated region
      $region13: #{tpu_custom_call.1} parent=5 // pred_check
        %p78 = pneg %p77
      $region14: #{tpu_custom_call.1} parent=5 // pred_check_branch
        %80 = sbr.rel (%p78) target = $region16
      $region15: #{tpu_custom_call.1} parent=5 // pred_region
        // Predicated region
        $region17: #{tpu_custom_call.1} parent=15 // pred_check
          %p81 = pneg %p30
        $region18: #{tpu_custom_call.1} parent=15 // pred_check_branch
          %83 = sbr.rel (%p81) target = $region20
        $region19: #{tpu_custom_call.1} parent=15 // pred_region
          %s84 = sand.u32 %s20, 1
          %s85 = sand.u32 %s20, 1
          %s86 = smul.addr %s85, 864
          %s87 = scalar_lea.vmem [#allocation2], %s86
          %s88 = smul.u32 3, %s10
          %s89 = smul.addr %s88, 9
          %s90 = smul.addr %s89, 8
          %s91 = scalar_lea.vmem %s0, %s90
          // Predicated region
          $region21: #{tpu_custom_call.1} parent=19 // pred_check
            _
          $region22: #{tpu_custom_call.1} parent=19 // pred_check_branch
            %93 = sbr.rel (0) target = $region24
          $region23: #{tpu_custom_call.1} parent=19 // pred_region
            // Predicated region
            $region25: #{tpu_custom_call.1} parent=23 // pred_check
              _
            $region26: #{tpu_custom_call.1} parent=23 // pred_check_branch
              %95 = sbr.rel (0) target = $region28
            $region27: #{tpu_custom_call.1} parent=23 // pred_region
              // Predicated region
              $region40: #{tpu_custom_call.1} parent=27 // pred_check
                _
              $region41: #{tpu_custom_call.1} parent=27 // pred_check_branch
                %325 = sbr.rel (0) target = $region43
              $region42: #{tpu_custom_call.1} parent=27 // pred_region
                loop: start=0, step=1, limit=1
                $region44: #{tpu_custom_call.1} parent=42 // loop_pre_header
                  _
                $region45: #{tpu_custom_call.1} parent=42 // loop_header
                  %s327 = sphi 0, %s331
                  %p328 = scmp.ge.s32.totalorder %s327, 1
                  %s332 = sphi %s91, %s91
                  %s333 = sphi %s87, %s87
                $region46: #{tpu_custom_call.1} parent=42 // loop_header_branch
                  %330 = sbr.rel (%p328) target = $region50
                $region47: #{tpu_custom_call.1} parent=42 // loop_body
                  %v334 = vld [vmem:[%s332] sm:$0xff]
                  %335 = vst [vmem:[%s333] sm:$0xff] %v334
                  %v336 = vld [vmem:[%s332 + $0x8] sm:$0xff]
                  %337 = vst [vmem:[%s333 + $0x8] sm:$0xff] %v336
                  %v338 = vld [vmem:[%s332 + $0x10] sm:$0xff]
                  %339 = vst [vmem:[%s333 + $0x10] sm:$0xff] %v338
                  %v340 = vld [vmem:[%s332 + $0x18] sm:$0xff]
                  %341 = vst [vmem:[%s333 + $0x18] sm:$0xff] %v340
                  %v342 = vld [vmem:[%s332 + $0x20] sm:$0xff]
                  %343 = vst [vmem:[%s333 + $0x20] sm:$0xff] %v342
                  %v344 = vld [vmem:[%s332 + $0x28] sm:$0xff]
                  %345 = vst [vmem:[%s333 + $0x28] sm:$0xff] %v344
                  %v346 = vld [vmem:[%s332 + $0x30] sm:$0xff]
                  %347 = vst [vmem:[%s333 + $0x30] sm:$0xff] %v346
                  %v348 = vld [vmem:[%s332 + $0x38] sm:$0xff]
                  %349 = vst [vmem:[%s333 + $0x38] sm:$0xff] %v348
                  %v350 = vld [vmem:[%s332 + $0x40] sm:$0xff]
                  %351 = vst [vmem:[%s333 + $0x40] sm:$0xff] %v350
                  %v352 = vld [vmem:[%s332 + $0x48] sm:$0xff]
                  %353 = vst [vmem:[%s333 + $0x48] sm:$0xff] %v352
                  %v354 = vld [vmem:[%s332 + $0x50] sm:$0xff]
                  %355 = vst [vmem:[%s333 + $0x50] sm:$0xff] %v354
                  %v356 = vld [vmem:[%s332 + $0x58] sm:$0xff]
                  %357 = vst [vmem:[%s333 + $0x58] sm:$0xff] %v356
                  %v358 = vld [vmem:[%s332 + $0x60] sm:$0xff]
                  %359 = vst [vmem:[%s333 + $0x60] sm:$0xff] %v358
                  %v360 = vld [vmem:[%s332 + $0x68] sm:$0xff]
                  %361 = vst [vmem:[%s333 + $0x68] sm:$0xff] %v360
                  %v362 = vld [vmem:[%s332 + $0x70] sm:$0xff]
                  %363 = vst [vmem:[%s333 + $0x70] sm:$0xff] %v362
                  %v364 = vld [vmem:[%s332 + $0x78] sm:$0xff]
                  %365 = vst [vmem:[%s333 + $0x78] sm:$0xff] %v364
                  %v366 = vld [vmem:[%s332 + $0x80] sm:$0xff]
                  %367 = vst [vmem:[%s333 + $0x80] sm:$0xff] %v366
                  %v368 = vld [vmem:[%s332 + $0x88] sm:$0xff]
                  %369 = vst [vmem:[%s333 + $0x88] sm:$0xff] %v368
                  %v370 = vld [vmem:[%s332 + $0x90] sm:$0xff]
                  %371 = vst [vmem:[%s333 + $0x90] sm:$0xff] %v370
                  %v372 = vld [vmem:[%s332 + $0x98] sm:$0xff]
                  %373 = vst [vmem:[%s333 + $0x98] sm:$0xff] %v372
                  %v374 = vld [vmem:[%s332 + $0xa0] sm:$0xff]
                  %375 = vst [vmem:[%s333 + $0xa0] sm:$0xff] %v374
                  %v376 = vld [vmem:[%s332 + $0xa8] sm:$0xff]
                  %377 = vst [vmem:[%s333 + $0xa8] sm:$0xff] %v376
                  %v378 = vld [vmem:[%s332 + $0xb0] sm:$0xff]
                  %379 = vst [vmem:[%s333 + $0xb0] sm:$0xff] %v378
                  %v380 = vld [vmem:[%s332 + $0xb8] sm:$0xff]
                  %381 = vst [vmem:[%s333 + $0xb8] sm:$0xff] %v380
                  %v382 = vld [vmem:[%s332 + $0xc0] sm:$0xff]
                  %383 = vst [vmem:[%s333 + $0xc0] sm:$0xff] %v382
                  %v384 = vld [vmem:[%s332 + $0xc8] sm:$0xff]
                  %385 = vst [vmem:[%s333 + $0xc8] sm:$0xff] %v384
                  %v386 = vld [vmem:[%s332 + $0xd0] sm:$0xff]
                  %387 = vst [vmem:[%s333 + $0xd0] sm:$0xff] %v386
                  %v388 = vld [vmem:[%s332 + $0x1b0] sm:$0xff]
                  %389 = vst [vmem:[%s333 + $0xd8] sm:$0xff] %v388
                  %v390 = vld [vmem:[%s332 + $0x1b8] sm:$0xff]
                  %391 = vst [vmem:[%s333 + $0xe0] sm:$0xff] %v390
                  %v392 = vld [vmem:[%s332 + $0x1c0] sm:$0xff]
                  %393 = vst [vmem:[%s333 + $0xe8] sm:$0xff] %v392
                  %v394 = vld [vmem:[%s332 + $0x1c8] sm:$0xff]
                  %395 = vst [vmem:[%s333 + $0xf0] sm:$0xff] %v394
                  %v396 = vld [vmem:[%s332 + $0x1d0] sm:$0xff]
                  %397 = vst [vmem:[%s333 + $0xf8] sm:$0xff] %v396
                  %v398 = vld [vmem:[%s332 + $0x1d8] sm:$0xff]
                  %399 = vst [vmem:[%s333 + $0x100] sm:$0xff] %v398
                  %v400 = vld [vmem:[%s332 + $0x1e0] sm:$0xff]
                  %401 = vst [vmem:[%s333 + $0x108] sm:$0xff] %v400
                  %v402 = vld [vmem:[%s332 + $0x1e8] sm:$0xff]
                  %403 = vst [vmem:[%s333 + $0x110] sm:$0xff] %v402
                  %v404 = vld [vmem:[%s332 + $0x1f0] sm:$0xff]
                  %405 = vst [vmem:[%s333 + $0x118] sm:$0xff] %v404
                  %v406 = vld [vmem:[%s332 + $0x1f8] sm:$0xff]
                  %407 = vst [vmem:[%s333 + $0x120] sm:$0xff] %v406
                  %v408 = vld [vmem:[%s332 + $0x200] sm:$0xff]
                  %409 = vst [vmem:[%s333 + $0x128] sm:$0xff] %v408
                  %v410 = vld [vmem:[%s332 + $0x208] sm:$0xff]
                  %411 = vst [vmem:[%s333 + $0x130] sm:$0xff] %v410
                  %v412 = vld [vmem:[%s332 + $0x210] sm:$0xff]
                  %413 = vst [vmem:[%s333 + $0x138] sm:$0xff] %v412
                  %v414 = vld [vmem:[%s332 + $0x218] sm:$0xff]
                  %415 = vst [vmem:[%s333 + $0x140] sm:$0xff] %v414
                  %v416 = vld [vmem:[%s332 + $0x220] sm:$0xff]
                  %417 = vst [vmem:[%s333 + $0x148] sm:$0xff] %v416
                  %v418 = vld [vmem:[%s332 + $0x228] sm:$0xff]
                  %419 = vst [vmem:[%s333 + $0x150] sm:$0xff] %v418
                  %v420 = vld [vmem:[%s332 + $0x230] sm:$0xff]
                  %421 = vst [vmem:[%s333 + $0x158] sm:$0xff] %v420
                  %v422 = vld [vmem:[%s332 + $0x238] sm:$0xff]
                  %423 = vst [vmem:[%s333 + $0x160] sm:$0xff] %v422
                  %v424 = vld [vmem:[%s332 + $0x240] sm:$0xff]
                  %425 = vst [vmem:[%s333 + $0x168] sm:$0xff] %v424
                  %v426 = vld [vmem:[%s332 + $0x248] sm:$0xff]
                  %427 = vst [vmem:[%s333 + $0x170] sm:$0xff] %v426
                  %v428 = vld [vmem:[%s332 + $0x250] sm:$0xff]
                  %429 = vst [vmem:[%s333 + $0x178] sm:$0xff] %v428
                  %v430 = vld [vmem:[%s332 + $0x258] sm:$0xff]
                  %431 = vst [vmem:[%s333 + $0x180] sm:$0xff] %v430
                  %v432 = vld [vmem:[%s332 + $0x260] sm:$0xff]
                  %433 = vst [vmem:[%s333 + $0x188] sm:$0xff] %v432
                  %v434 = vld [vmem:[%s332 + $0x268] sm:$0xff]
                  %435 = vst [vmem:[%s333 + $0x190] sm:$0xff] %v434
                  %v436 = vld [vmem:[%s332 + $0x270] sm:$0xff]
                  %437 = vst [vmem:[%s333 + $0x198] sm:$0xff] %v436
                  %v438 = vld [vmem:[%s332 + $0x278] sm:$0xff]
                  %439 = vst [vmem:[%s333 + $0x1a0] sm:$0xff] %v438
                  %v440 = vld [vmem:[%s332 + $0x280] sm:$0xff]
                  %441 = vst [vmem:[%s333 + $0x1a8] sm:$0xff] %v440
                  %v442 = vld [vmem:[%s332 + $0x360] sm:$0xff]
                  %443 = vst [vmem:[%s333 + $0x1b0] sm:$0xff] %v442
                  %v444 = vld [vmem:[%s332 + $0x368] sm:$0xff]
                  %445 = vst [vmem:[%s333 + $0x1b8] sm:$0xff] %v444
                  %v446 = vld [vmem:[%s332 + $0x370] sm:$0xff]
                  %447 = vst [vmem:[%s333 + $0x1c0] sm:$0xff] %v446
                  %v448 = vld [vmem:[%s332 + $0x378] sm:$0xff]
                  %449 = vst [vmem:[%s333 + $0x1c8] sm:$0xff] %v448
                  %v450 = vld [vmem:[%s332 + $0x380] sm:$0xff]
                  %451 = vst [vmem:[%s333 + $0x1d0] sm:$0xff] %v450
                  %v452 = vld [vmem:[%s332 + $0x388] sm:$0xff]
                  %453 = vst [vmem:[%s333 + $0x1d8] sm:$0xff] %v452
                  %v454 = vld [vmem:[%s332 + $0x390] sm:$0xff]
                  %455 = vst [vmem:[%s333 + $0x1e0] sm:$0xff] %v454
                  %v456 = vld [vmem:[%s332 + $0x398] sm:$0xff]
                  %457 = vst [vmem:[%s333 + $0x1e8] sm:$0xff] %v456
                  %v458 = vld [vmem:[%s332 + $0x3a0] sm:$0xff]
                  %459 = vst [vmem:[%s333 + $0x1f0] sm:$0xff] %v458
                  %v460 = vld [vmem:[%s332 + $0x3a8] sm:$0xff]
                  %461 = vst [vmem:[%s333 + $0x1f8] sm:$0xff] %v460
                  %v462 = vld [vmem:[%s332 + $0x3b0] sm:$0xff]
                  %463 = vst [vmem:[%s333 + $0x200] sm:$0xff] %v462
                  %v464 = vld [vmem:[%s332 + $0x3b8] sm:$0xff]
                  %465 = vst [vmem:[%s333 + $0x208] sm:$0xff] %v464
                  %v466 = vld [vmem:[%s332 + $0x3c0] sm:$0xff]
                  %467 = vst [vmem:[%s333 + $0x210] sm:$0xff] %v466
                  %v468 = vld [vmem:[%s332 + $0x3c8] sm:$0xff]
                  %469 = vst [vmem:[%s333 + $0x218] sm:$0xff] %v468
                  %v470 = vld [vmem:[%s332 + $0x3d0] sm:$0xff]
                  %471 = vst [vmem:[%s333 + $0x220] sm:$0xff] %v470
                  %v472 = vld [vmem:[%s332 + $0x3d8] sm:$0xff]
                  %473 = vst [vmem:[%s333 + $0x228] sm:$0xff] %v472
                  %v474 = vld [vmem:[%s332 + $0x3e0] sm:$0xff]
                  %475 = vst [vmem:[%s333 + $0x230] sm:$0xff] %v474
                  %v476 = vld [vmem:[%s332 + $0x3e8] sm:$0xff]
                  %477 = vst [vmem:[%s333 + $0x238] sm:$0xff] %v476
                  %v478 = vld [vmem:[%s332 + $0x3f0] sm:$0xff]
                  %479 = vst [vmem:[%s333 + $0x240] sm:$0xff] %v478
                  %v480 = vld [vmem:[%s332 + $0x3f8] sm:$0xff]
                  %481 = vst [vmem:[%s333 + $0x248] sm:$0xff] %v480
                  %v482 = vld [vmem:[%s332 + $0x400] sm:$0xff]
                  %483 = vst [vmem:[%s333 + $0x250] sm:$0xff] %v482
                  %v484 = vld [vmem:[%s332 + $0x408] sm:$0xff]
                  %485 = vst [vmem:[%s333 + $0x258] sm:$0xff] %v484
                  %v486 = vld [vmem:[%s332 + $0x410] sm:$0xff]
                  %487 = vst [vmem:[%s333 + $0x260] sm:$0xff] %v486
                  %v488 = vld [vmem:[%s332 + $0x418] sm:$0xff]
                  %489 = vst [vmem:[%s333 + $0x268] sm:$0xff] %v488
                  %v490 = vld [vmem:[%s332 + $0x420] sm:$0xff]
                  %491 = vst [vmem:[%s333 + $0x270] sm:$0xff] %v490
                  %v492 = vld [vmem:[%s332 + $0x428] sm:$0xff]
                  %493 = vst [vmem:[%s333 + $0x278] sm:$0xff] %v492
                  %v494 = vld [vmem:[%s332 + $0x430] sm:$0xff]
                  %495 = vst [vmem:[%s333 + $0x280] sm:$0xff] %v494
                  %v496 = vld [vmem:[%s332 + $0x510] sm:$0xff]
                  %497 = vst [vmem:[%s333 + $0x288] sm:$0xff] %v496
                  %v498 = vld [vmem:[%s332 + $0x518] sm:$0xff]
                  %499 = vst [vmem:[%s333 + $0x290] sm:$0xff] %v498
                  %v500 = vld [vmem:[%s332 + $0x520] sm:$0xff]
                  %501 = vst [vmem:[%s333 + $0x298] sm:$0xff] %v500
                  %v502 = vld [vmem:[%s332 + $0x528] sm:$0xff]
                  %503 = vst [vmem:[%s333 + $0x2a0] sm:$0xff] %v502
                  %v504 = vld [vmem:[%s332 + $0x530] sm:$0xff]
                  %505 = vst [vmem:[%s333 + $0x2a8] sm:$0xff] %v504
                  %v506 = vld [vmem:[%s332 + $0x538] sm:$0xff]
                  %507 = vst [vmem:[%s333 + $0x2b0] sm:$0xff] %v506
                  %v508 = vld [vmem:[%s332 + $0x540] sm:$0xff]
                  %509 = vst [vmem:[%s333 + $0x2b8] sm:$0xff] %v508
                  %v510 = vld [vmem:[%s332 + $0x548] sm:$0xff]
                  %511 = vst [vmem:[%s333 + $0x2c0] sm:$0xff] %v510
                  %v512 = vld [vmem:[%s332 + $0x550] sm:$0xff]
                  %513 = vst [vmem:[%s333 + $0x2c8] sm:$0xff] %v512
                  %v514 = vld [vmem:[%s332 + $0x558] sm:$0xff]
                  %515 = vst [vmem:[%s333 + $0x2d0] sm:$0xff] %v514
                  %v516 = vld [vmem:[%s332 + $0x560] sm:$0xff]
                  %517 = vst [vmem:[%s333 + $0x2d8] sm:$0xff] %v516
                  %v518 = vld [vmem:[%s332 + $0x568] sm:$0xff]
                  %519 = vst [vmem:[%s333 + $0x2e0] sm:$0xff] %v518
                  %v520 = vld [vmem:[%s332 + $0x570] sm:$0xff]
                  %521 = vst [vmem:[%s333 + $0x2e8] sm:$0xff] %v520
                  %v522 = vld [vmem:[%s332 + $0x578] sm:$0xff]
                  %523 = vst [vmem:[%s333 + $0x2f0] sm:$0xff] %v522
                  %v524 = vld [vmem:[%s332 + $0x580] sm:$0xff]
                  %525 = vst [vmem:[%s333 + $0x2f8] sm:$0xff] %v524
                  %v526 = vld [vmem:[%s332 + $0x588] sm:$0xff]
                  %527 = vst [vmem:[%s333 + $0x300] sm:$0xff] %v526
                  %v528 = vld [vmem:[%s332 + $0x590] sm:$0xff]
                  %529 = vst [vmem:[%s333 + $0x308] sm:$0xff] %v528
                  %v530 = vld [vmem:[%s332 + $0x598] sm:$0xff]
                  %531 = vst [vmem:[%s333 + $0x310] sm:$0xff] %v530
                  %v532 = vld [vmem:[%s332 + $0x5a0] sm:$0xff]
                  %533 = vst [vmem:[%s333 + $0x318] sm:$0xff] %v532
                  %v534 = vld [vmem:[%s332 + $0x5a8] sm:$0xff]
                  %535 = vst [vmem:[%s333 + $0x320] sm:$0xff] %v534
                  %v536 = vld [vmem:[%s332 + $0x5b0] sm:$0xff]
                  %537 = vst [vmem:[%s333 + $0x328] sm:$0xff] %v536
                  %v538 = vld [vmem:[%s332 + $0x5b8] sm:$0xff]
                  %539 = vst [vmem:[%s333 + $0x330] sm:$0xff] %v538
                  %v540 = vld [vmem:[%s332 + $0x5c0] sm:$0xff]
                  %541 = vst [vmem:[%s333 + $0x338] sm:$0xff] %v540
                  %v542 = vld [vmem:[%s332 + $0x5c8] sm:$0xff]
                  %543 = vst [vmem:[%s333 + $0x340] sm:$0xff] %v542
                  %v544 = vld [vmem:[%s332 + $0x5d0] sm:$0xff]
                  %545 = vst [vmem:[%s333 + $0x348] sm:$0xff] %v544
                  %v546 = vld [vmem:[%s332 + $0x5d8] sm:$0xff]
                  %547 = vst [vmem:[%s333 + $0x350] sm:$0xff] %v546
                  %v548 = vld [vmem:[%s332 + $0x5e0] sm:$0xff]
                  %549 = vst [vmem:[%s333 + $0x358] sm:$0xff] %v548
                $region48: #{tpu_custom_call.1} parent=42 // loop_footer
                  %s331 = sadd.s32 1, %s327
                $region49: #{tpu_custom_call.1} parent=42 // loop_footer_branch
                  %326 = sbr.rel target = $region45
                $region50: #{tpu_custom_call.1} parent=42 // loop_exit
                  _
              $region43: #{tpu_custom_call.1} parent=27 // pred_fallthru
                _
              // Predicated region
              $region51: #{tpu_custom_call.1} parent=27 // pred_check
                _
              $region52: #{tpu_custom_call.1} parent=27 // pred_check_branch
                %551 = sbr.rel target = $region54
              $region53: #{tpu_custom_call.1} parent=27 // pred_region
                _
              $region54: #{tpu_custom_call.1} parent=27 // pred_fallthru
                _
            $region28: #{tpu_custom_call.1} parent=23 // pred_fallthru
              _
            // Predicated region
            $region29: #{tpu_custom_call.1} parent=23 // pred_check
              _
            $region30: #{tpu_custom_call.1} parent=23 // pred_check_branch
              %97 = sbr.rel target = $region32
            $region31: #{tpu_custom_call.1} parent=23 // pred_region
              %s99 = ssub.s32 256, 1
              loop: start=0, step=1, limit=1
              $region33: #{tpu_custom_call.1} parent=31 // loop_pre_header
                _
              $region34: #{tpu_custom_call.1} parent=31 // loop_header
                %s101 = sphi 0, %s105
                %p102 = scmp.ge.s32.totalorder %s101, 1
                %s106 = sphi %s91, %s91
                %s107 = sphi %s87, %s87
              $region35: #{tpu_custom_call.1} parent=31 // loop_header_branch
                %104 = sbr.rel (%p102) target = $region39
              $region36: #{tpu_custom_call.1} parent=31 // loop_body
                %v108 = vld [vmem:[%s106] sm:%s99]
                %109 = vst [vmem:[%s107] sm:%s99] %v108
                %v110 = vld [vmem:[%s106 + $0x8] sm:%s99]
                %111 = vst [vmem:[%s107 + $0x8] sm:%s99] %v110
                %v112 = vld [vmem:[%s106 + $0x10] sm:%s99]
                %113 = vst [vmem:[%s107 + $0x10] sm:%s99] %v112
                %v114 = vld [vmem:[%s106 + $0x18] sm:%s99]
                %115 = vst [vmem:[%s107 + $0x18] sm:%s99] %v114
                %v116 = vld [vmem:[%s106 + $0x20] sm:%s99]
                %117 = vst [vmem:[%s107 + $0x20] sm:%s99] %v116
                %v118 = vld [vmem:[%s106 + $0x28] sm:%s99]
                %119 = vst [vmem:[%s107 + $0x28] sm:%s99] %v118
                %v120 = vld [vmem:[%s106 + $0x30] sm:%s99]
                %121 = vst [vmem:[%s107 + $0x30] sm:%s99] %v120
                %v122 = vld [vmem:[%s106 + $0x38] sm:%s99]
                %123 = vst [vmem:[%s107 + $0x38] sm:%s99] %v122
                %v124 = vld [vmem:[%s106 + $0x40] sm:%s99]
                %125 = vst [vmem:[%s107 + $0x40] sm:%s99] %v124
                %v126 = vld [vmem:[%s106 + $0x48] sm:%s99]
                %127 = vst [vmem:[%s107 + $0x48] sm:%s99] %v126
                %v128 = vld [vmem:[%s106 + $0x50] sm:%s99]
                %129 = vst [vmem:[%s107 + $0x50] sm:%s99] %v128
                %v130 = vld [vmem:[%s106 + $0x58] sm:%s99]
                %131 = vst [vmem:[%s107 + $0x58] sm:%s99] %v130
                %v132 = vld [vmem:[%s106 + $0x60] sm:%s99]
                %133 = vst [vmem:[%s107 + $0x60] sm:%s99] %v132
                %v134 = vld [vmem:[%s106 + $0x68] sm:%s99]
                %135 = vst [vmem:[%s107 + $0x68] sm:%s99] %v134
                %v136 = vld [vmem:[%s106 + $0x70] sm:%s99]
                %137 = vst [vmem:[%s107 + $0x70] sm:%s99] %v136
                %v138 = vld [vmem:[%s106 + $0x78] sm:%s99]
                %139 = vst [vmem:[%s107 + $0x78] sm:%s99] %v138
                %v140 = vld [vmem:[%s106 + $0x80] sm:%s99]
                %141 = vst [vmem:[%s107 + $0x80] sm:%s99] %v140
                %v142 = vld [vmem:[%s106 + $0x88] sm:%s99]
                %143 = vst [vmem:[%s107 + $0x88] sm:%s99] %v142
                %v144 = vld [vmem:[%s106 + $0x90] sm:%s99]
                %145 = vst [vmem:[%s107 + $0x90] sm:%s99] %v144
                %v146 = vld [vmem:[%s106 + $0x98] sm:%s99]
                %147 = vst [vmem:[%s107 + $0x98] sm:%s99] %v146
                %v148 = vld [vmem:[%s106 + $0xa0] sm:%s99]
                %149 = vst [vmem:[%s107 + $0xa0] sm:%s99] %v148
                %v150 = vld [vmem:[%s106 + $0xa8] sm:%s99]
                %151 = vst [vmem:[%s107 + $0xa8] sm:%s99] %v150
                %v152 = vld [vmem:[%s106 + $0xb0] sm:%s99]
                %153 = vst [vmem:[%s107 + $0xb0] sm:%s99] %v152
                %v154 = vld [vmem:[%s106 + $0xb8] sm:%s99]
                %155 = vst [vmem:[%s107 + $0xb8] sm:%s99] %v154
                %v156 = vld [vmem:[%s106 + $0xc0] sm:%s99]
                %157 = vst [vmem:[%s107 + $0xc0] sm:%s99] %v156
                %v158 = vld [vmem:[%s106 + $0xc8] sm:%s99]
                %159 = vst [vmem:[%s107 + $0xc8] sm:%s99] %v158
                %v160 = vld [vmem:[%s106 + $0xd0] sm:%s99]
                %161 = vst [vmem:[%s107 + $0xd0] sm:%s99] %v160
                %v162 = vld [vmem:[%s106 + $0x1b0] sm:%s99]
                %163 = vst [vmem:[%s107 + $0xd8] sm:%s99] %v162
                %v164 = vld [vmem:[%s106 + $0x1b8] sm:%s99]
                %165 = vst [vmem:[%s107 + $0xe0] sm:%s99] %v164
                %v166 = vld [vmem:[%s106 + $0x1c0] sm:%s99]
                %167 = vst [vmem:[%s107 + $0xe8] sm:%s99] %v166
                %v168 = vld [vmem:[%s106 + $0x1c8] sm:%s99]
                %169 = vst [vmem:[%s107 + $0xf0] sm:%s99] %v168
                %v170 = vld [vmem:[%s106 + $0x1d0] sm:%s99]
                %171 = vst [vmem:[%s107 + $0xf8] sm:%s99] %v170
                %v172 = vld [vmem:[%s106 + $0x1d8] sm:%s99]
                %173 = vst [vmem:[%s107 + $0x100] sm:%s99] %v172
                %v174 = vld [vmem:[%s106 + $0x1e0] sm:%s99]
                %175 = vst [vmem:[%s107 + $0x108] sm:%s99] %v174
                %v176 = vld [vmem:[%s106 + $0x1e8] sm:%s99]
                %177 = vst [vmem:[%s107 + $0x110] sm:%s99] %v176
                %v178 = vld [vmem:[%s106 + $0x1f0] sm:%s99]
                %179 = vst [vmem:[%s107 + $0x118] sm:%s99] %v178
                %v180 = vld [vmem:[%s106 + $0x1f8] sm:%s99]
                %181 = vst [vmem:[%s107 + $0x120] sm:%s99] %v180
                %v182 = vld [vmem:[%s106 + $0x200] sm:%s99]
                %183 = vst [vmem:[%s107 + $0x128] sm:%s99] %v182
                %v184 = vld [vmem:[%s106 + $0x208] sm:%s99]
                %185 = vst [vmem:[%s107 + $0x130] sm:%s99] %v184
                %v186 = vld [vmem:[%s106 + $0x210] sm:%s99]
                %187 = vst [vmem:[%s107 + $0x138] sm:%s99] %v186
                %v188 = vld [vmem:[%s106 + $0x218] sm:%s99]
                %189 = vst [vmem:[%s107 + $0x140] sm:%s99] %v188
                %v190 = vld [vmem:[%s106 + $0x220] sm:%s99]
                %191 = vst [vmem:[%s107 + $0x148] sm:%s99] %v190
                %v192 = vld [vmem:[%s106 + $0x228] sm:%s99]
                %193 = vst [vmem:[%s107 + $0x150] sm:%s99] %v192
                %v194 = vld [vmem:[%s106 + $0x230] sm:%s99]
                %195 = vst [vmem:[%s107 + $0x158] sm:%s99] %v194
                %v196 = vld [vmem:[%s106 + $0x238] sm:%s99]
                %197 = vst [vmem:[%s107 + $0x160] sm:%s99] %v196
                %v198 = vld [vmem:[%s106 + $0x240] sm:%s99]
                %199 = vst [vmem:[%s107 + $0x168] sm:%s99] %v198
                %v200 = vld [vmem:[%s106 + $0x248] sm:%s99]
                %201 = vst [vmem:[%s107 + $0x170] sm:%s99] %v200
                %v202 = vld [vmem:[%s106 + $0x250] sm:%s99]
                %203 = vst [vmem:[%s107 + $0x178] sm:%s99] %v202
                %v204 = vld [vmem:[%s106 + $0x258] sm:%s99]
                %205 = vst [vmem:[%s107 + $0x180] sm:%s99] %v204
                %v206 = vld [vmem:[%s106 + $0x260] sm:%s99]
                %207 = vst [vmem:[%s107 + $0x188] sm:%s99] %v206
                %v208 = vld [vmem:[%s106 + $0x268] sm:%s99]
                %209 = vst [vmem:[%s107 + $0x190] sm:%s99] %v208
                %v210 = vld [vmem:[%s106 + $0x270] sm:%s99]
                %211 = vst [vmem:[%s107 + $0x198] sm:%s99] %v210
                %v212 = vld [vmem:[%s106 + $0x278] sm:%s99]
                %213 = vst [vmem:[%s107 + $0x1a0] sm:%s99] %v212
                %v214 = vld [vmem:[%s106 + $0x280] sm:%s99]
                %215 = vst [vmem:[%s107 + $0x1a8] sm:%s99] %v214
                %v216 = vld [vmem:[%s106 + $0x360] sm:%s99]
                %217 = vst [vmem:[%s107 + $0x1b0] sm:%s99] %v216
                %v218 = vld [vmem:[%s106 + $0x368] sm:%s99]
                %219 = vst [vmem:[%s107 + $0x1b8] sm:%s99] %v218
                %v220 = vld [vmem:[%s106 + $0x370] sm:%s99]
                %221 = vst [vmem:[%s107 + $0x1c0] sm:%s99] %v220
                %v222 = vld [vmem:[%s106 + $0x378] sm:%s99]
                %223 = vst [vmem:[%s107 + $0x1c8] sm:%s99] %v222
                %v224 = vld [vmem:[%s106 + $0x380] sm:%s99]
                %225 = vst [vmem:[%s107 + $0x1d0] sm:%s99] %v224
                %v226 = vld [vmem:[%s106 + $0x388] sm:%s99]
                %227 = vst [vmem:[%s107 + $0x1d8] sm:%s99] %v226
                %v228 = vld [vmem:[%s106 + $0x390] sm:%s99]
                %229 = vst [vmem:[%s107 + $0x1e0] sm:%s99] %v228
                %v230 = vld [vmem:[%s106 + $0x398] sm:%s99]
                %231 = vst [vmem:[%s107 + $0x1e8] sm:%s99] %v230
                %v232 = vld [vmem:[%s106 + $0x3a0] sm:%s99]
                %233 = vst [vmem:[%s107 + $0x1f0] sm:%s99] %v232
                %v234 = vld [vmem:[%s106 + $0x3a8] sm:%s99]
                %235 = vst [vmem:[%s107 + $0x1f8] sm:%s99] %v234
                %v236 = vld [vmem:[%s106 + $0x3b0] sm:%s99]
                %237 = vst [vmem:[%s107 + $0x200] sm:%s99] %v236
                %v238 = vld [vmem:[%s106 + $0x3b8] sm:%s99]
                %239 = vst [vmem:[%s107 + $0x208] sm:%s99] %v238
                %v240 = vld [vmem:[%s106 + $0x3c0] sm:%s99]
                %241 = vst [vmem:[%s107 + $0x210] sm:%s99] %v240
                %v242 = vld [vmem:[%s106 + $0x3c8] sm:%s99]
                %243 = vst [vmem:[%s107 + $0x218] sm:%s99] %v242
                %v244 = vld [vmem:[%s106 + $0x3d0] sm:%s99]
                %245 = vst [vmem:[%s107 + $0x220] sm:%s99] %v244
                %v246 = vld [vmem:[%s106 + $0x3d8] sm:%s99]
                %247 = vst [vmem:[%s107 + $0x228] sm:%s99] %v246
                %v248 = vld [vmem:[%s106 + $0x3e0] sm:%s99]
                %249 = vst [vmem:[%s107 + $0x230] sm:%s99] %v248
                %v250 = vld [vmem:[%s106 + $0x3e8] sm:%s99]
                %251 = vst [vmem:[%s107 + $0x238] sm:%s99] %v250
                %v252 = vld [vmem:[%s106 + $0x3f0] sm:%s99]
                %253 = vst [vmem:[%s107 + $0x240] sm:%s99] %v252
                %v254 = vld [vmem:[%s106 + $0x3f8] sm:%s99]
                %255 = vst [vmem:[%s107 + $0x248] sm:%s99] %v254
                %v256 = vld [vmem:[%s106 + $0x400] sm:%s99]
                %257 = vst [vmem:[%s107 + $0x250] sm:%s99] %v256
                %v258 = vld [vmem:[%s106 + $0x408] sm:%s99]
                %259 = vst [vmem:[%s107 + $0x258] sm:%s99] %v258
                %v260 = vld [vmem:[%s106 + $0x410] sm:%s99]
                %261 = vst [vmem:[%s107 + $0x260] sm:%s99] %v260
                %v262 = vld [vmem:[%s106 + $0x418] sm:%s99]
                %263 = vst [vmem:[%s107 + $0x268] sm:%s99] %v262
                %v264 = vld [vmem:[%s106 + $0x420] sm:%s99]
                %265 = vst [vmem:[%s107 + $0x270] sm:%s99] %v264
                %v266 = vld [vmem:[%s106 + $0x428] sm:%s99]
                %267 = vst [vmem:[%s107 + $0x278] sm:%s99] %v266
                %v268 = vld [vmem:[%s106 + $0x430] sm:%s99]
                %269 = vst [vmem:[%s107 + $0x280] sm:%s99] %v268
                %v270 = vld [vmem:[%s106 + $0x510] sm:%s99]
                %271 = vst [vmem:[%s107 + $0x288] sm:%s99] %v270
                %v272 = vld [vmem:[%s106 + $0x518] sm:%s99]
                %273 = vst [vmem:[%s107 + $0x290] sm:%s99] %v272
                %v274 = vld [vmem:[%s106 + $0x520] sm:%s99]
                %275 = vst [vmem:[%s107 + $0x298] sm:%s99] %v274
                %v276 = vld [vmem:[%s106 + $0x528] sm:%s99]
                %277 = vst [vmem:[%s107 + $0x2a0] sm:%s99] %v276
                %v278 = vld [vmem:[%s106 + $0x530] sm:%s99]
                %279 = vst [vmem:[%s107 + $0x2a8] sm:%s99] %v278
                %v280 = vld [vmem:[%s106 + $0x538] sm:%s99]
                %281 = vst [vmem:[%s107 + $0x2b0] sm:%s99] %v280
                %v282 = vld [vmem:[%s106 + $0x540] sm:%s99]
                %283 = vst [vmem:[%s107 + $0x2b8] sm:%s99] %v282
                %v284 = vld [vmem:[%s106 + $0x548] sm:%s99]
                %285 = vst [vmem:[%s107 + $0x2c0] sm:%s99] %v284
                %v286 = vld [vmem:[%s106 + $0x550] sm:%s99]
                %287 = vst [vmem:[%s107 + $0x2c8] sm:%s99] %v286
                %v288 = vld [vmem:[%s106 + $0x558] sm:%s99]
                %289 = vst [vmem:[%s107 + $0x2d0] sm:%s99] %v288
                %v290 = vld [vmem:[%s106 + $0x560] sm:%s99]
                %291 = vst [vmem:[%s107 + $0x2d8] sm:%s99] %v290
                %v292 = vld [vmem:[%s106 + $0x568] sm:%s99]
                %293 = vst [vmem:[%s107 + $0x2e0] sm:%s99] %v292
                %v294 = vld [vmem:[%s106 + $0x570] sm:%s99]
                %295 = vst [vmem:[%s107 + $0x2e8] sm:%s99] %v294
                %v296 = vld [vmem:[%s106 + $0x578] sm:%s99]
                %297 = vst [vmem:[%s107 + $0x2f0] sm:%s99] %v296
                %v298 = vld [vmem:[%s106 + $0x580] sm:%s99]
                %299 = vst [vmem:[%s107 + $0x2f8] sm:%s99] %v298
                %v300 = vld [vmem:[%s106 + $0x588] sm:%s99]
                %301 = vst [vmem:[%s107 + $0x300] sm:%s99] %v300
                %v302 = vld [vmem:[%s106 + $0x590] sm:%s99]
                %303 = vst [vmem:[%s107 + $0x308] sm:%s99] %v302
                %v304 = vld [vmem:[%s106 + $0x598] sm:%s99]
                %305 = vst [vmem:[%s107 + $0x310] sm:%s99] %v304
                %v306 = vld [vmem:[%s106 + $0x5a0] sm:%s99]
                %307 = vst [vmem:[%s107 + $0x318] sm:%s99] %v306
                %v308 = vld [vmem:[%s106 + $0x5a8] sm:%s99]
                %309 = vst [vmem:[%s107 + $0x320] sm:%s99] %v308
                %v310 = vld [vmem:[%s106 + $0x5b0] sm:%s99]
                %311 = vst [vmem:[%s107 + $0x328] sm:%s99] %v310
                %v312 = vld [vmem:[%s106 + $0x5b8] sm:%s99]
                %313 = vst [vmem:[%s107 + $0x330] sm:%s99] %v312
                %v314 = vld [vmem:[%s106 + $0x5c0] sm:%s99]
                %315 = vst [vmem:[%s107 + $0x338] sm:%s99] %v314
                %v316 = vld [vmem:[%s106 + $0x5c8] sm:%s99]
                %317 = vst [vmem:[%s107 + $0x340] sm:%s99] %v316
                %v318 = vld [vmem:[%s106 + $0x5d0] sm:%s99]
                %319 = vst [vmem:[%s107 + $0x348] sm:%s99] %v318
                %v320 = vld [vmem:[%s106 + $0x5d8] sm:%s99]
                %321 = vst [vmem:[%s107 + $0x350] sm:%s99] %v320
                %v322 = vld [vmem:[%s106 + $0x5e0] sm:%s99]
                %323 = vst [vmem:[%s107 + $0x358] sm:%s99] %v322
              $region37: #{tpu_custom_call.1} parent=31 // loop_footer
                %s105 = sadd.s32 1, %s101
              $region38: #{tpu_custom_call.1} parent=31 // loop_footer_branch
                %100 = sbr.rel target = $region34
              $region39: #{tpu_custom_call.1} parent=31 // loop_exit
                _
            $region32: #{tpu_custom_call.1} parent=23 // pred_fallthru
              _
          $region24: #{tpu_custom_call.1} parent=19 // pred_fallthru
            _
          %552 = vnop
        $region20: #{tpu_custom_call.1} parent=15 // pred_fallthru
          _
      $region16: #{tpu_custom_call.1} parent=5 // pred_fallthru
        _
      %p553 = scmp.le.s32.totalorder 1, %s10
      %p554 = scmp.lt.s32.totalorder %s10, 3
      %p555 = pnand %p553, %p554
      %p556 = pneg %p555
      // Predicated region
      $region55: #{tpu_custom_call.1} parent=5 // pred_check
        _
      $region56: #{tpu_custom_call.1} parent=5 // pred_check_branch
        %558 = sbr.rel (%p555) target = $region58
      $region57: #{tpu_custom_call.1} parent=5 // pred_region
        %s559 = ssub.s32 %s10, 1
        %s560 = sand.u32 %s23, 1
        %s561 = sand.u32 %s23, 1
        %s562 = smul.addr %s561, 864
        %s563 = scalar_lea.vmem [#allocation2], %s562
        // Predicated region
        $region59: #{tpu_custom_call.1} parent=57 // pred_check
          %p564 = pneg %p36
        $region60: #{tpu_custom_call.1} parent=57 // pred_check_branch
          %566 = sbr.rel (%p564) target = $region62
        $region61: #{tpu_custom_call.1} parent=57 // pred_region
          _
        $region62: #{tpu_custom_call.1} parent=57 // pred_fallthru
          _
        %s567 = sand.u32 %s23, 1
        %s568 = sand.u32 %s23, 1
        %s569 = smul.addr %s568, 864
        %s570 = scalar_lea.vmem [#allocation2], %s569
        %p571 = pneg %p36
        %p572 = pneg %p33
        %p573 = pneg %p62
        %p574 = pneg %p59
        %s575 = sand.u32 %s49, 1
        %s576 = scalar_lea.sflag [#allocation4], %s575
        %s577 = sand.u32 %s49, 1
        %s578 = smul.addr %s577, 192
        %s579 = scalar_lea.vmem [#allocation3], %s578
        %s580 = smul.u32 3, %s15
        %s581 = smul.u32 3, %s15
        %v582 = vld [vmem:[%s563] sm:$0xff]
        %v583 = vld [vmem:[%s563 + $0x8] sm:$0xff]
        %v584 = vld [vmem:[%s563 + $0x10] sm:$0xff]
        %v585 = vld [vmem:[%s563 + $0x18] sm:$0xff]
        %v586 = vld [vmem:[%s563 + $0x20] sm:$0xff]
        %v587 = vld [vmem:[%s563 + $0x28] sm:$0xff]
        %v588 = vld [vmem:[%s563 + $0x30] sm:$0xff]
        %v589 = vld [vmem:[%s563 + $0x38] sm:$0xff]
        %v590 = vld [vmem:[%s563 + $0x48] sm:$0xff]
        %v591 = vld [vmem:[%s563 + $0x50] sm:$0xff]
        %v592 = vld [vmem:[%s563 + $0x58] sm:$0xff]
        %v593 = vld [vmem:[%s563 + $0x60] sm:$0xff]
        %v594 = vld [vmem:[%s563 + $0x68] sm:$0xff]
        %v595 = vld [vmem:[%s563 + $0x70] sm:$0xff]
        %v596 = vld [vmem:[%s563 + $0x78] sm:$0xff]
        %v597 = vld [vmem:[%s563 + $0x80] sm:$0xff]
        %v598 = vld [vmem:[%s563 + $0x90] sm:$0xff]
        %v599 = vld [vmem:[%s563 + $0x98] sm:$0xff]
        %v600 = vld [vmem:[%s563 + $0xa0] sm:$0xff]
        %v601 = vld [vmem:[%s563 + $0xa8] sm:$0xff]
        %v602 = vld [vmem:[%s563 + $0xb0] sm:$0xff]
        %v603 = vld [vmem:[%s563 + $0xb8] sm:$0xff]
        %v604 = vld [vmem:[%s563 + $0xc0] sm:$0xff]
        %v605 = vld [vmem:[%s563 + $0xc8] sm:$0xff]
        %v606 = vld [vmem:[%s563 + $0x2] sm:$0xff]
        %v607 = vld [vmem:[%s563 + $0xa] sm:$0xff]
        %v608 = vld [vmem:[%s563 + $0x12] sm:$0xff]
        %v609 = vld [vmem:[%s563 + $0x1a] sm:$0xff]
        %v610 = vld [vmem:[%s563 + $0x22] sm:$0xff]
        %v611 = vld [vmem:[%s563 + $0x2a] sm:$0xff]
        %v612 = vld [vmem:[%s563 + $0x32] sm:$0xff]
        %v613 = vld [vmem:[%s563 + $0x3a] sm:$0xff]
        %v614 = vld [vmem:[%s563 + $0x4a] sm:$0xff]
        %v615 = vld [vmem:[%s563 + $0x52] sm:$0xff]
        %v616 = vld [vmem:[%s563 + $0x5a] sm:$0xff]
        %v617 = vld [vmem:[%s563 + $0x62] sm:$0xff]
        %v618 = vld [vmem:[%s563 + $0x6a] sm:$0xff]
        %v619 = vld [vmem:[%s563 + $0x72] sm:$0xff]
        %v620 = vld [vmem:[%s563 + $0x7a] sm:$0xff]
        %v621 = vld [vmem:[%s563 + $0x82] sm:$0xff]
        %v622 = vld [vmem:[%s563 + $0x92] sm:$0xff]
        %v623 = vld [vmem:[%s563 + $0x9a] sm:$0xff]
        %v624 = vld [vmem:[%s563 + $0xa2] sm:$0xff]
        %v625 = vld [vmem:[%s563 + $0xaa] sm:$0xff]
        %v626 = vld [vmem:[%s563 + $0xb2] sm:$0xff]
        %v627 = vld [vmem:[%s563 + $0xba] sm:$0xff]
        %v628 = vld [vmem:[%s563 + $0xc2] sm:$0xff]
        %v629 = vld [vmem:[%s563 + $0xca] sm:$0xff]
        %v630 = vadd.f32 %v582, %v606
        %v631 = vadd.f32 %v583, %v607
        %v632 = vadd.f32 %v584, %v608
        %v633 = vadd.f32 %v585, %v609
        %v634 = vadd.f32 %v586, %v610
        %v635 = vadd.f32 %v587, %v611
        %v636 = vadd.f32 %v588, %v612
        %v637 = vadd.f32 %v589, %v613
        %v638 = vadd.f32 %v590, %v614
        %v639 = vadd.f32 %v591, %v615
        %v640 = vadd.f32 %v592, %v616
        %v641 = vadd.f32 %v593, %v617
        %v642 = vadd.f32 %v594, %v618
        %v643 = vadd.f32 %v595, %v619
        %v644 = vadd.f32 %v596, %v620
        %v645 = vadd.f32 %v597, %v621
        %v646 = vadd.f32 %v598, %v622
        %v647 = vadd.f32 %v599, %v623
        %v648 = vadd.f32 %v600, %v624
        %v649 = vadd.f32 %v601, %v625
        %v650 = vadd.f32 %v602, %v626
        %v651 = vadd.f32 %v603, %v627
        %v652 = vadd.f32 %v604, %v628
        %v653 = vadd.f32 %v605, %v629
        %v654 = vmul.f32 %v630, 0.0625
        %v655 = vmul.f32 %v631, 0.0625
        %v656 = vmul.f32 %v632, 0.0625
        %v657 = vmul.f32 %v633, 0.0625
        %v658 = vmul.f32 %v634, 0.0625
        %v659 = vmul.f32 %v635, 0.0625
        %v660 = vmul.f32 %v636, 0.0625
        %v661 = vmul.f32 %v637, 0.0625
        %v662 = vmul.f32 %v638, 0.0625
        %v663 = vmul.f32 %v639, 0.0625
        %v664 = vmul.f32 %v640, 0.0625
        %v665 = vmul.f32 %v641, 0.0625
        %v666 = vmul.f32 %v642, 0.0625
        %v667 = vmul.f32 %v643, 0.0625
        %v668 = vmul.f32 %v644, 0.0625
        %v669 = vmul.f32 %v645, 0.0625
        %v670 = vmul.f32 %v646, 0.0625
        %v671 = vmul.f32 %v647, 0.0625
        %v672 = vmul.f32 %v648, 0.0625
        %v673 = vmul.f32 %v649, 0.0625
        %v674 = vmul.f32 %v650, 0.0625
        %v675 = vmul.f32 %v651, 0.0625
        %v676 = vmul.f32 %v652, 0.0625
        %v677 = vmul.f32 %v653, 0.0625
        %v678 = vld [vmem:[%s563 + $0x1] sm:$0xff]
        %v679 = vld [vmem:[%s563 + $0x9] sm:$0xff]
        %v680 = vld [vmem:[%s563 + $0x11] sm:$0xff]
        %v681 = vld [vmem:[%s563 + $0x19] sm:$0xff]
        %v682 = vld [vmem:[%s563 + $0x21] sm:$0xff]
        %v683 = vld [vmem:[%s563 + $0x29] sm:$0xff]
        %v684 = vld [vmem:[%s563 + $0x31] sm:$0xff]
        %v685 = vld [vmem:[%s563 + $0x39] sm:$0xff]
        %v686 = vld [vmem:[%s563 + $0x49] sm:$0xff]
        %v687 = vld [vmem:[%s563 + $0x51] sm:$0xff]
        %v688 = vld [vmem:[%s563 + $0x59] sm:$0xff]
        %v689 = vld [vmem:[%s563 + $0x61] sm:$0xff]
        %v690 = vld [vmem:[%s563 + $0x69] sm:$0xff]
        %v691 = vld [vmem:[%s563 + $0x71] sm:$0xff]
        %v692 = vld [vmem:[%s563 + $0x79] sm:$0xff]
        %v693 = vld [vmem:[%s563 + $0x81] sm:$0xff]
        %v694 = vld [vmem:[%s563 + $0x91] sm:$0xff]
        %v695 = vld [vmem:[%s563 + $0x99] sm:$0xff]
        %v696 = vld [vmem:[%s563 + $0xa1] sm:$0xff]
        %v697 = vld [vmem:[%s563 + $0xa9] sm:$0xff]
        %v698 = vld [vmem:[%s563 + $0xb1] sm:$0xff]
        %v699 = vld [vmem:[%s563 + $0xb9] sm:$0xff]
        %v700 = vld [vmem:[%s563 + $0xc1] sm:$0xff]
        %v701 = vld [vmem:[%s563 + $0xc9] sm:$0xff]
        %v702 = vmul.f32 %v678, 0.375
        %v703 = vmul.f32 %v679, 0.375
        %v704 = vmul.f32 %v680, 0.375
        %v705 = vmul.f32 %v681, 0.375
        %v706 = vmul.f32 %v682, 0.375
        %v707 = vmul.f32 %v683, 0.375
        %v708 = vmul.f32 %v684, 0.375
        %v709 = vmul.f32 %v685, 0.375
        %v710 = vmul.f32 %v686, 0.375
        %v711 = vmul.f32 %v687, 0.375
        %v712 = vmul.f32 %v688, 0.375
        %v713 = vmul.f32 %v689, 0.375
        %v714 = vmul.f32 %v690, 0.375
        %v715 = vmul.f32 %v691, 0.375
        %v716 = vmul.f32 %v692, 0.375
        %v717 = vmul.f32 %v693, 0.375
        %v718 = vmul.f32 %v694, 0.375
        %v719 = vmul.f32 %v695, 0.375
        %v720 = vmul.f32 %v696, 0.375
        %v721 = vmul.f32 %v697, 0.375
        %v722 = vmul.f32 %v698, 0.375
        %v723 = vmul.f32 %v699, 0.375
        %v724 = vmul.f32 %v700, 0.375
        %v725 = vmul.f32 %v701, 0.375
        %v726 = vadd.f32 %v654, %v702
        %v727 = vadd.f32 %v655, %v703
        %v728 = vadd.f32 %v656, %v704
        %v729 = vadd.f32 %v657, %v705
        %v730 = vadd.f32 %v658, %v706
        %v731 = vadd.f32 %v659, %v707
        %v732 = vadd.f32 %v660, %v708
        %v733 = vadd.f32 %v661, %v709
        %v734 = vadd.f32 %v662, %v710
        %v735 = vadd.f32 %v663, %v711
        %v736 = vadd.f32 %v664, %v712
        %v737 = vadd.f32 %v665, %v713
        %v738 = vadd.f32 %v666, %v714
        %v739 = vadd.f32 %v667, %v715
        %v740 = vadd.f32 %v668, %v716
        %v741 = vadd.f32 %v669, %v717
        %v742 = vadd.f32 %v670, %v718
        %v743 = vadd.f32 %v671, %v719
        %v744 = vadd.f32 %v672, %v720
        %v745 = vadd.f32 %v673, %v721
        %v746 = vadd.f32 %v674, %v722
        %v747 = vadd.f32 %v675, %v723
        %v748 = vadd.f32 %v676, %v724
        %v749 = vadd.f32 %v677, %v725
        %774 = vrot.lane.b32.xlu0 %v726, 126
        %v775 = vpop.permute.xlu0 %774
        %776 = vrot.lane.b32.xlu0 %v727, 126
        %v777 = vpop.permute.xlu0 %776
        %778 = vrot.lane.b32.xlu0 %v728, 126
        %v779 = vpop.permute.xlu0 %778
        %780 = vrot.lane.b32.xlu0 %v729, 126
        %v781 = vpop.permute.xlu0 %780
        %782 = vrot.lane.b32.xlu0 %v730, 126
        %v783 = vpop.permute.xlu0 %782
        %784 = vrot.lane.b32.xlu0 %v731, 126
        %v785 = vpop.permute.xlu0 %784
        %786 = vrot.lane.b32.xlu0 %v732, 126
        %v787 = vpop.permute.xlu0 %786
        %788 = vrot.lane.b32.xlu0 %v733, 126
        %v789 = vpop.permute.xlu0 %788
        %790 = vrot.lane.b32.xlu0 %v734, 126
        %v791 = vpop.permute.xlu0 %790
        %792 = vrot.lane.b32.xlu0 %v735, 126
        %v793 = vpop.permute.xlu0 %792
        %794 = vrot.lane.b32.xlu0 %v736, 126
        %v795 = vpop.permute.xlu0 %794
        %796 = vrot.lane.b32.xlu0 %v737, 126
        %v797 = vpop.permute.xlu0 %796
        %798 = vrot.lane.b32.xlu0 %v738, 126
        %v799 = vpop.permute.xlu0 %798
        %800 = vrot.lane.b32.xlu0 %v739, 126
        %v801 = vpop.permute.xlu0 %800
        %802 = vrot.lane.b32.xlu0 %v740, 126
        %v803 = vpop.permute.xlu0 %802
        %804 = vrot.lane.b32.xlu0 %v741, 126
        %v805 = vpop.permute.xlu0 %804
        %806 = vrot.lane.b32.xlu0 %v742, 126
        %v807 = vpop.permute.xlu0 %806
        %808 = vrot.lane.b32.xlu0 %v743, 126
        %v809 = vpop.permute.xlu0 %808
        %810 = vrot.lane.b32.xlu0 %v744, 126
        %v811 = vpop.permute.xlu0 %810
        %812 = vrot.lane.b32.xlu0 %v745, 126
        %v813 = vpop.permute.xlu0 %812
        %814 = vrot.lane.b32.xlu0 %v746, 126
        %v815 = vpop.permute.xlu0 %814
        %816 = vrot.lane.b32.xlu0 %v747, 126
        %v817 = vpop.permute.xlu0 %816
        %818 = vrot.lane.b32.xlu0 %v748, 126
        %v819 = vpop.permute.xlu0 %818
        %820 = vrot.lane.b32.xlu0 %v749, 126
        %v821 = vpop.permute.xlu0 %820
        %v846 = vadd.f32 %v726, %v775
        %v847 = vadd.f32 %v727, %v777
        %v848 = vadd.f32 %v728, %v779
        %v849 = vadd.f32 %v729, %v781
        %v850 = vadd.f32 %v730, %v783
        %v851 = vadd.f32 %v731, %v785
        %v852 = vadd.f32 %v732, %v787
        %v853 = vadd.f32 %v733, %v789
        %v854 = vadd.f32 %v734, %v791
        %v855 = vadd.f32 %v735, %v793
        %v856 = vadd.f32 %v736, %v795
        %v857 = vadd.f32 %v737, %v797
        %v858 = vadd.f32 %v738, %v799
        %v859 = vadd.f32 %v739, %v801
        %v860 = vadd.f32 %v740, %v803
        %v861 = vadd.f32 %v741, %v805
        %v862 = vadd.f32 %v742, %v807
        %v863 = vadd.f32 %v743, %v809
        %v864 = vadd.f32 %v744, %v811
        %v865 = vadd.f32 %v745, %v813
        %v866 = vadd.f32 %v746, %v815
        %v867 = vadd.f32 %v747, %v817
        %v868 = vadd.f32 %v748, %v819
        %v869 = vadd.f32 %v749, %v821
        %v870 = vmul.f32 %v846, 0.0625
        %v871 = vmul.f32 %v847, 0.0625
        %v872 = vmul.f32 %v848, 0.0625
        %v873 = vmul.f32 %v849, 0.0625
        %v874 = vmul.f32 %v850, 0.0625
        %v875 = vmul.f32 %v851, 0.0625
        %v876 = vmul.f32 %v852, 0.0625
        %v877 = vmul.f32 %v853, 0.0625
        %v878 = vmul.f32 %v854, 0.0625
        %v879 = vmul.f32 %v855, 0.0625
        %v880 = vmul.f32 %v856, 0.0625
        %v881 = vmul.f32 %v857, 0.0625
        %v882 = vmul.f32 %v858, 0.0625
        %v883 = vmul.f32 %v859, 0.0625
        %v884 = vmul.f32 %v860, 0.0625
        %v885 = vmul.f32 %v861, 0.0625
        %v886 = vmul.f32 %v862, 0.0625
        %v887 = vmul.f32 %v863, 0.0625
        %v888 = vmul.f32 %v864, 0.0625
        %v889 = vmul.f32 %v865, 0.0625
        %v890 = vmul.f32 %v866, 0.0625
        %v891 = vmul.f32 %v867, 0.0625
        %v892 = vmul.f32 %v868, 0.0625
        %v893 = vmul.f32 %v869, 0.0625
        %v894 = vmul.f32 %v726, 0.375
        %v895 = vmul.f32 %v727, 0.375
        %v896 = vmul.f32 %v728, 0.375
        %v897 = vmul.f32 %v729, 0.375
        %v898 = vmul.f32 %v730, 0.375
        %v899 = vmul.f32 %v731, 0.375
        %v900 = vmul.f32 %v732, 0.375
        %v901 = vmul.f32 %v733, 0.375
        %v902 = vmul.f32 %v734, 0.375
        %v903 = vmul.f32 %v735, 0.375
        %v904 = vmul.f32 %v736, 0.375
        %v905 = vmul.f32 %v737, 0.375
        %v906 = vmul.f32 %v738, 0.375
        %v907 = vmul.f32 %v739, 0.375
        %v908 = vmul.f32 %v740, 0.375
        %v909 = vmul.f32 %v741, 0.375
        %v910 = vmul.f32 %v742, 0.375
        %v911 = vmul.f32 %v743, 0.375
        %v912 = vmul.f32 %v744, 0.375
        %v913 = vmul.f32 %v745, 0.375
        %v914 = vmul.f32 %v746, 0.375
        %v915 = vmul.f32 %v747, 0.375
        %v916 = vmul.f32 %v748, 0.375
        %v917 = vmul.f32 %v749, 0.375
        %942 = vrot.lane.b32.xlu0 %v894, 127
        %v943 = vpop.permute.xlu0 %942
        %944 = vrot.lane.b32.xlu0 %v895, 127
        %v945 = vpop.permute.xlu0 %944
        %946 = vrot.lane.b32.xlu0 %v896, 127
        %v947 = vpop.permute.xlu0 %946
        %948 = vrot.lane.b32.xlu0 %v897, 127
        %v949 = vpop.permute.xlu0 %948
        %950 = vrot.lane.b32.xlu0 %v898, 127
        %v951 = vpop.permute.xlu0 %950
        %952 = vrot.lane.b32.xlu0 %v899, 127
        %v953 = vpop.permute.xlu0 %952
        %954 = vrot.lane.b32.xlu0 %v900, 127
        %v955 = vpop.permute.xlu0 %954
        %956 = vrot.lane.b32.xlu0 %v901, 127
        %v957 = vpop.permute.xlu0 %956
        %958 = vrot.lane.b32.xlu0 %v902, 127
        %v959 = vpop.permute.xlu0 %958
        %960 = vrot.lane.b32.xlu0 %v903, 127
        %v961 = vpop.permute.xlu0 %960
        %962 = vrot.lane.b32.xlu0 %v904, 127
        %v963 = vpop.permute.xlu0 %962
        %964 = vrot.lane.b32.xlu0 %v905, 127
        %v965 = vpop.permute.xlu0 %964
        %966 = vrot.lane.b32.xlu0 %v906, 127
        %v967 = vpop.permute.xlu0 %966
        %968 = vrot.lane.b32.xlu0 %v907, 127
        %v969 = vpop.permute.xlu0 %968
        %970 = vrot.lane.b32.xlu0 %v908, 127
        %v971 = vpop.permute.xlu0 %970
        %972 = vrot.lane.b32.xlu0 %v909, 127
        %v973 = vpop.permute.xlu0 %972
        %974 = vrot.lane.b32.xlu0 %v910, 127
        %v975 = vpop.permute.xlu0 %974
        %976 = vrot.lane.b32.xlu0 %v911, 127
        %v977 = vpop.permute.xlu0 %976
        %978 = vrot.lane.b32.xlu0 %v912, 127
        %v979 = vpop.permute.xlu0 %978
        %980 = vrot.lane.b32.xlu0 %v913, 127
        %v981 = vpop.permute.xlu0 %980
        %982 = vrot.lane.b32.xlu0 %v914, 127
        %v983 = vpop.permute.xlu0 %982
        %984 = vrot.lane.b32.xlu0 %v915, 127
        %v985 = vpop.permute.xlu0 %984
        %986 = vrot.lane.b32.xlu0 %v916, 127
        %v987 = vpop.permute.xlu0 %986
        %988 = vrot.lane.b32.xlu0 %v917, 127
        %v989 = vpop.permute.xlu0 %988
        %v1014 = vadd.f32 %v870, %v943
        %v1015 = vadd.f32 %v871, %v945
        %v1016 = vadd.f32 %v872, %v947
        %v1017 = vadd.f32 %v873, %v949
        %v1018 = vadd.f32 %v874, %v951
        %v1019 = vadd.f32 %v875, %v953
        %v1020 = vadd.f32 %v876, %v955
        %v1021 = vadd.f32 %v877, %v957
        %v1022 = vadd.f32 %v878, %v959
        %v1023 = vadd.f32 %v879, %v961
        %v1024 = vadd.f32 %v880, %v963
        %v1025 = vadd.f32 %v881, %v965
        %v1026 = vadd.f32 %v882, %v967
        %v1027 = vadd.f32 %v883, %v969
        %v1028 = vadd.f32 %v884, %v971
        %v1029 = vadd.f32 %v885, %v973
        %v1030 = vadd.f32 %v886, %v975
        %v1031 = vadd.f32 %v887, %v977
        %v1032 = vadd.f32 %v888, %v979
        %v1033 = vadd.f32 %v889, %v981
        %v1034 = vadd.f32 %v890, %v983
        %v1035 = vadd.f32 %v891, %v985
        %v1036 = vadd.f32 %v892, %v987
        %v1037 = vadd.f32 %v893, %v989
        %s1038 = scalar_lea.vmem %s563, 216 [#allocation2]
        %v1039 = vld [vmem:[%s1038] sm:$0xff]
        %v1040 = vld [vmem:[%s1038 + $0x8] sm:$0xff]
        %v1041 = vld [vmem:[%s1038 + $0x10] sm:$0xff]
        %v1042 = vld [vmem:[%s1038 + $0x18] sm:$0xff]
        %v1043 = vld [vmem:[%s1038 + $0x20] sm:$0xff]
        %v1044 = vld [vmem:[%s1038 + $0x28] sm:$0xff]
        %v1045 = vld [vmem:[%s1038 + $0x30] sm:$0xff]
        %v1046 = vld [vmem:[%s1038 + $0x38] sm:$0xff]
        %v1047 = vld [vmem:[%s1038 + $0x48] sm:$0xff]
        %v1048 = vld [vmem:[%s1038 + $0x50] sm:$0xff]
        %v1049 = vld [vmem:[%s1038 + $0x58] sm:$0xff]
        %v1050 = vld [vmem:[%s1038 + $0x60] sm:$0xff]
        %v1051 = vld [vmem:[%s1038 + $0x68] sm:$0xff]
        %v1052 = vld [vmem:[%s1038 + $0x70] sm:$0xff]
        %v1053 = vld [vmem:[%s1038 + $0x78] sm:$0xff]
        %v1054 = vld [vmem:[%s1038 + $0x80] sm:$0xff]
        %v1055 = vld [vmem:[%s1038 + $0x90] sm:$0xff]
        %v1056 = vld [vmem:[%s1038 + $0x98] sm:$0xff]
        %v1057 = vld [vmem:[%s1038 + $0xa0] sm:$0xff]
        %v1058 = vld [vmem:[%s1038 + $0xa8] sm:$0xff]
        %v1059 = vld [vmem:[%s1038 + $0xb0] sm:$0xff]
        %v1060 = vld [vmem:[%s1038 + $0xb8] sm:$0xff]
        %v1061 = vld [vmem:[%s1038 + $0xc0] sm:$0xff]
        %v1062 = vld [vmem:[%s1038 + $0xc8] sm:$0xff]
        %v1063 = vld [vmem:[%s1038 + $0x2] sm:$0xff]
        %v1064 = vld [vmem:[%s1038 + $0xa] sm:$0xff]
        %v1065 = vld [vmem:[%s1038 + $0x12] sm:$0xff]
        %v1066 = vld [vmem:[%s1038 + $0x1a] sm:$0xff]
        %v1067 = vld [vmem:[%s1038 + $0x22] sm:$0xff]
        %v1068 = vld [vmem:[%s1038 + $0x2a] sm:$0xff]
        %v1069 = vld [vmem:[%s1038 + $0x32] sm:$0xff]
        %v1070 = vld [vmem:[%s1038 + $0x3a] sm:$0xff]
        %v1071 = vld [vmem:[%s1038 + $0x4a] sm:$0xff]
        %v1072 = vld [vmem:[%s1038 + $0x52] sm:$0xff]
        %v1073 = vld [vmem:[%s1038 + $0x5a] sm:$0xff]
        %v1074 = vld [vmem:[%s1038 + $0x62] sm:$0xff]
        %v1075 = vld [vmem:[%s1038 + $0x6a] sm:$0xff]
        %v1076 = vld [vmem:[%s1038 + $0x72] sm:$0xff]
        %v1077 = vld [vmem:[%s1038 + $0x7a] sm:$0xff]
        %v1078 = vld [vmem:[%s1038 + $0x82] sm:$0xff]
        %v1079 = vld [vmem:[%s1038 + $0x92] sm:$0xff]
        %v1080 = vld [vmem:[%s1038 + $0x9a] sm:$0xff]
        %v1081 = vld [vmem:[%s1038 + $0xa2] sm:$0xff]
        %v1082 = vld [vmem:[%s1038 + $0xaa] sm:$0xff]
        %v1083 = vld [vmem:[%s1038 + $0xb2] sm:$0xff]
        %v1084 = vld [vmem:[%s1038 + $0xba] sm:$0xff]
        %v1085 = vld [vmem:[%s1038 + $0xc2] sm:$0xff]
        %v1086 = vld [vmem:[%s1038 + $0xca] sm:$0xff]
        %v1087 = vadd.f32 %v1039, %v1063
        %v1088 = vadd.f32 %v1040, %v1064
        %v1089 = vadd.f32 %v1041, %v1065
        %v1090 = vadd.f32 %v1042, %v1066
        %v1091 = vadd.f32 %v1043, %v1067
        %v1092 = vadd.f32 %v1044, %v1068
        %v1093 = vadd.f32 %v1045, %v1069
        %v1094 = vadd.f32 %v1046, %v1070
        %v1095 = vadd.f32 %v1047, %v1071
        %v1096 = vadd.f32 %v1048, %v1072
        %v1097 = vadd.f32 %v1049, %v1073
        %v1098 = vadd.f32 %v1050, %v1074
        %v1099 = vadd.f32 %v1051, %v1075
        %v1100 = vadd.f32 %v1052, %v1076
        %v1101 = vadd.f32 %v1053, %v1077
        %v1102 = vadd.f32 %v1054, %v1078
        %v1103 = vadd.f32 %v1055, %v1079
        %v1104 = vadd.f32 %v1056, %v1080
        %v1105 = vadd.f32 %v1057, %v1081
        %v1106 = vadd.f32 %v1058, %v1082
        %v1107 = vadd.f32 %v1059, %v1083
        %v1108 = vadd.f32 %v1060, %v1084
        %v1109 = vadd.f32 %v1061, %v1085
        %v1110 = vadd.f32 %v1062, %v1086
        %v1111 = vmul.f32 %v1087, 0.0625
        %v1112 = vmul.f32 %v1088, 0.0625
        %v1113 = vmul.f32 %v1089, 0.0625
        %v1114 = vmul.f32 %v1090, 0.0625
        %v1115 = vmul.f32 %v1091, 0.0625
        %v1116 = vmul.f32 %v1092, 0.0625
        %v1117 = vmul.f32 %v1093, 0.0625
        %v1118 = vmul.f32 %v1094, 0.0625
        %v1119 = vmul.f32 %v1095, 0.0625
        %v1120 = vmul.f32 %v1096, 0.0625
        %v1121 = vmul.f32 %v1097, 0.0625
        %v1122 = vmul.f32 %v1098, 0.0625
        %v1123 = vmul.f32 %v1099, 0.0625
        %v1124 = vmul.f32 %v1100, 0.0625
        %v1125 = vmul.f32 %v1101, 0.0625
        %v1126 = vmul.f32 %v1102, 0.0625
        %v1127 = vmul.f32 %v1103, 0.0625
        %v1128 = vmul.f32 %v1104, 0.0625
        %v1129 = vmul.f32 %v1105, 0.0625
        %v1130 = vmul.f32 %v1106, 0.0625
        %v1131 = vmul.f32 %v1107, 0.0625
        %v1132 = vmul.f32 %v1108, 0.0625
        %v1133 = vmul.f32 %v1109, 0.0625
        %v1134 = vmul.f32 %v1110, 0.0625
        %v1135 = vld [vmem:[%s1038 + $0x1] sm:$0xff]
        %v1136 = vld [vmem:[%s1038 + $0x9] sm:$0xff]
        %v1137 = vld [vmem:[%s1038 + $0x11] sm:$0xff]
        %v1138 = vld [vmem:[%s1038 + $0x19] sm:$0xff]
        %v1139 = vld [vmem:[%s1038 + $0x21] sm:$0xff]
        %v1140 = vld [vmem:[%s1038 + $0x29] sm:$0xff]
        %v1141 = vld [vmem:[%s1038 + $0x31] sm:$0xff]
        %v1142 = vld [vmem:[%s1038 + $0x39] sm:$0xff]
        %v1143 = vld [vmem:[%s1038 + $0x49] sm:$0xff]
        %v1144 = vld [vmem:[%s1038 + $0x51] sm:$0xff]
        %v1145 = vld [vmem:[%s1038 + $0x59] sm:$0xff]
        %v1146 = vld [vmem:[%s1038 + $0x61] sm:$0xff]
        %v1147 = vld [vmem:[%s1038 + $0x69] sm:$0xff]
        %v1148 = vld [vmem:[%s1038 + $0x71] sm:$0xff]
        %v1149 = vld [vmem:[%s1038 + $0x79] sm:$0xff]
        %v1150 = vld [vmem:[%s1038 + $0x81] sm:$0xff]
        %v1151 = vld [vmem:[%s1038 + $0x91] sm:$0xff]
        %v1152 = vld [vmem:[%s1038 + $0x99] sm:$0xff]
        %v1153 = vld [vmem:[%s1038 + $0xa1] sm:$0xff]
        %v1154 = vld [vmem:[%s1038 + $0xa9] sm:$0xff]
        %v1155 = vld [vmem:[%s1038 + $0xb1] sm:$0xff]
        %v1156 = vld [vmem:[%s1038 + $0xb9] sm:$0xff]
        %v1157 = vld [vmem:[%s1038 + $0xc1] sm:$0xff]
        %v1158 = vld [vmem:[%s1038 + $0xc9] sm:$0xff]
        %v1159 = vmul.f32 %v1135, 0.375
        %v1160 = vmul.f32 %v1136, 0.375
        %v1161 = vmul.f32 %v1137, 0.375
        %v1162 = vmul.f32 %v1138, 0.375
        %v1163 = vmul.f32 %v1139, 0.375
        %v1164 = vmul.f32 %v1140, 0.375
        %v1165 = vmul.f32 %v1141, 0.375
        %v1166 = vmul.f32 %v1142, 0.375
        %v1167 = vmul.f32 %v1143, 0.375
        %v1168 = vmul.f32 %v1144, 0.375
        %v1169 = vmul.f32 %v1145, 0.375
        %v1170 = vmul.f32 %v1146, 0.375
        %v1171 = vmul.f32 %v1147, 0.375
        %v1172 = vmul.f32 %v1148, 0.375
        %v1173 = vmul.f32 %v1149, 0.375
        %v1174 = vmul.f32 %v1150, 0.375
        %v1175 = vmul.f32 %v1151, 0.375
        %v1176 = vmul.f32 %v1152, 0.375
        %v1177 = vmul.f32 %v1153, 0.375
        %v1178 = vmul.f32 %v1154, 0.375
        %v1179 = vmul.f32 %v1155, 0.375
        %v1180 = vmul.f32 %v1156, 0.375
        %v1181 = vmul.f32 %v1157, 0.375
        %v1182 = vmul.f32 %v1158, 0.375
        %v1183 = vadd.f32 %v1111, %v1159
        %v1184 = vadd.f32 %v1112, %v1160
        %v1185 = vadd.f32 %v1113, %v1161
        %v1186 = vadd.f32 %v1114, %v1162
        %v1187 = vadd.f32 %v1115, %v1163
        %v1188 = vadd.f32 %v1116, %v1164
        %v1189 = vadd.f32 %v1117, %v1165
        %v1190 = vadd.f32 %v1118, %v1166
        %v1191 = vadd.f32 %v1119, %v1167
        %v1192 = vadd.f32 %v1120, %v1168
        %v1193 = vadd.f32 %v1121, %v1169
        %v1194 = vadd.f32 %v1122, %v1170
        %v1195 = vadd.f32 %v1123, %v1171
        %v1196 = vadd.f32 %v1124, %v1172
        %v1197 = vadd.f32 %v1125, %v1173
        %v1198 = vadd.f32 %v1126, %v1174
        %v1199 = vadd.f32 %v1127, %v1175
        %v1200 = vadd.f32 %v1128, %v1176
        %v1201 = vadd.f32 %v1129, %v1177
        %v1202 = vadd.f32 %v1130, %v1178
        %v1203 = vadd.f32 %v1131, %v1179
        %v1204 = vadd.f32 %v1132, %v1180
        %v1205 = vadd.f32 %v1133, %v1181
        %v1206 = vadd.f32 %v1134, %v1182
        %1231 = vrot.lane.b32.xlu0 %v1183, 127
        %v1232 = vpop.permute.xlu0 %1231
        %1233 = vrot.lane.b32.xlu0 %v1184, 127
        %v1234 = vpop.permute.xlu0 %1233
        %1235 = vrot.lane.b32.xlu0 %v1185, 127
        %v1236 = vpop.permute.xlu0 %1235
        %1237 = vrot.lane.b32.xlu0 %v1186, 127
        %v1238 = vpop.permute.xlu0 %1237
        %1239 = vrot.lane.b32.xlu0 %v1187, 127
        %v1240 = vpop.permute.xlu0 %1239
        %1241 = vrot.lane.b32.xlu0 %v1188, 127
        %v1242 = vpop.permute.xlu0 %1241
        %1243 = vrot.lane.b32.xlu0 %v1189, 127
        %v1244 = vpop.permute.xlu0 %1243
        %1245 = vrot.lane.b32.xlu0 %v1190, 127
        %v1246 = vpop.permute.xlu0 %1245
        %1247 = vrot.lane.b32.xlu0 %v1191, 127
        %v1248 = vpop.permute.xlu0 %1247
        %1249 = vrot.lane.b32.xlu0 %v1192, 127
        %v1250 = vpop.permute.xlu0 %1249
        %1251 = vrot.lane.b32.xlu0 %v1193, 127
        %v1252 = vpop.permute.xlu0 %1251
        %1253 = vrot.lane.b32.xlu0 %v1194, 127
        %v1254 = vpop.permute.xlu0 %1253
        %1255 = vrot.lane.b32.xlu0 %v1195, 127
        %v1256 = vpop.permute.xlu0 %1255
        %1257 = vrot.lane.b32.xlu0 %v1196, 127
        %v1258 = vpop.permute.xlu0 %1257
        %1259 = vrot.lane.b32.xlu0 %v1197, 127
        %v1260 = vpop.permute.xlu0 %1259
        %1261 = vrot.lane.b32.xlu0 %v1198, 127
        %v1262 = vpop.permute.xlu0 %1261
        %1263 = vrot.lane.b32.xlu0 %v1199, 127
        %v1264 = vpop.permute.xlu0 %1263
        %1265 = vrot.lane.b32.xlu0 %v1200, 127
        %v1266 = vpop.permute.xlu0 %1265
        %1267 = vrot.lane.b32.xlu0 %v1201, 127
        %v1268 = vpop.permute.xlu0 %1267
        %1269 = vrot.lane.b32.xlu0 %v1202, 127
        %v1270 = vpop.permute.xlu0 %1269
        %1271 = vrot.lane.b32.xlu0 %v1203, 127
        %v1272 = vpop.permute.xlu0 %1271
        %1273 = vrot.lane.b32.xlu0 %v1204, 127
        %v1274 = vpop.permute.xlu0 %1273
        %1275 = vrot.lane.b32.xlu0 %v1205, 127
        %v1276 = vpop.permute.xlu0 %1275
        %1277 = vrot.lane.b32.xlu0 %v1206, 127
        %v1278 = vpop.permute.xlu0 %1277
        %v1303 = vadd.f32 %v1183, %v1232
        %v1304 = vadd.f32 %v1184, %v1234
        %v1305 = vadd.f32 %v1185, %v1236
        %v1306 = vadd.f32 %v1186, %v1238
        %v1307 = vadd.f32 %v1187, %v1240
        %v1308 = vadd.f32 %v1188, %v1242
        %v1309 = vadd.f32 %v1189, %v1244
        %v1310 = vadd.f32 %v1190, %v1246
        %v1311 = vadd.f32 %v1191, %v1248
        %v1312 = vadd.f32 %v1192, %v1250
        %v1313 = vadd.f32 %v1193, %v1252
        %v1314 = vadd.f32 %v1194, %v1254
        %v1315 = vadd.f32 %v1195, %v1256
        %v1316 = vadd.f32 %v1196, %v1258
        %v1317 = vadd.f32 %v1197, %v1260
        %v1318 = vadd.f32 %v1198, %v1262
        %v1319 = vadd.f32 %v1199, %v1264
        %v1320 = vadd.f32 %v1200, %v1266
        %v1321 = vadd.f32 %v1201, %v1268
        %v1322 = vadd.f32 %v1202, %v1270
        %v1323 = vadd.f32 %v1203, %v1272
        %v1324 = vadd.f32 %v1204, %v1274
        %v1325 = vadd.f32 %v1205, %v1276
        %v1326 = vadd.f32 %v1206, %v1278
        %v1327 = vmul.f32 %v1303, 0.25
        %v1328 = vmul.f32 %v1304, 0.25
        %v1329 = vmul.f32 %v1305, 0.25
        %v1330 = vmul.f32 %v1306, 0.25
        %v1331 = vmul.f32 %v1307, 0.25
        %v1332 = vmul.f32 %v1308, 0.25
        %v1333 = vmul.f32 %v1309, 0.25
        %v1334 = vmul.f32 %v1310, 0.25
        %v1335 = vmul.f32 %v1311, 0.25
        %v1336 = vmul.f32 %v1312, 0.25
        %v1337 = vmul.f32 %v1313, 0.25
        %v1338 = vmul.f32 %v1314, 0.25
        %v1339 = vmul.f32 %v1315, 0.25
        %v1340 = vmul.f32 %v1316, 0.25
        %v1341 = vmul.f32 %v1317, 0.25
        %v1342 = vmul.f32 %v1318, 0.25
        %v1343 = vmul.f32 %v1319, 0.25
        %v1344 = vmul.f32 %v1320, 0.25
        %v1345 = vmul.f32 %v1321, 0.25
        %v1346 = vmul.f32 %v1322, 0.25
        %v1347 = vmul.f32 %v1323, 0.25
        %v1348 = vmul.f32 %v1324, 0.25
        %v1349 = vmul.f32 %v1325, 0.25
        %v1350 = vmul.f32 %v1326, 0.25
        %v1351 = vadd.f32 %v1014, %v1327
        %v1352 = vadd.f32 %v1015, %v1328
        %v1353 = vadd.f32 %v1016, %v1329
        %v1354 = vadd.f32 %v1017, %v1330
        %v1355 = vadd.f32 %v1018, %v1331
        %v1356 = vadd.f32 %v1019, %v1332
        %v1357 = vadd.f32 %v1020, %v1333
        %v1358 = vadd.f32 %v1021, %v1334
        %v1359 = vadd.f32 %v1022, %v1335
        %v1360 = vadd.f32 %v1023, %v1336
        %v1361 = vadd.f32 %v1024, %v1337
        %v1362 = vadd.f32 %v1025, %v1338
        %v1363 = vadd.f32 %v1026, %v1339
        %v1364 = vadd.f32 %v1027, %v1340
        %v1365 = vadd.f32 %v1028, %v1341
        %v1366 = vadd.f32 %v1029, %v1342
        %v1367 = vadd.f32 %v1030, %v1343
        %v1368 = vadd.f32 %v1031, %v1344
        %v1369 = vadd.f32 %v1032, %v1345
        %v1370 = vadd.f32 %v1033, %v1346
        %v1371 = vadd.f32 %v1034, %v1347
        %v1372 = vadd.f32 %v1035, %v1348
        %v1373 = vadd.f32 %v1036, %v1349
        %v1374 = vadd.f32 %v1037, %v1350
        %s1375 = scalar_lea.vmem %s563, 432 [#allocation2]
        %v1376 = vld [vmem:[%s1375] sm:$0xff]
        %v1377 = vld [vmem:[%s1375 + $0x8] sm:$0xff]
        %v1378 = vld [vmem:[%s1375 + $0x10] sm:$0xff]
        %v1379 = vld [vmem:[%s1375 + $0x18] sm:$0xff]
        %v1380 = vld [vmem:[%s1375 + $0x20] sm:$0xff]
        %v1381 = vld [vmem:[%s1375 + $0x28] sm:$0xff]
        %v1382 = vld [vmem:[%s1375 + $0x30] sm:$0xff]
        %v1383 = vld [vmem:[%s1375 + $0x38] sm:$0xff]
        %v1384 = vld [vmem:[%s1375 + $0x48] sm:$0xff]
        %v1385 = vld [vmem:[%s1375 + $0x50] sm:$0xff]
        %v1386 = vld [vmem:[%s1375 + $0x58] sm:$0xff]
        %v1387 = vld [vmem:[%s1375 + $0x60] sm:$0xff]
        %v1388 = vld [vmem:[%s1375 + $0x68] sm:$0xff]
        %v1389 = vld [vmem:[%s1375 + $0x70] sm:$0xff]
        %v1390 = vld [vmem:[%s1375 + $0x78] sm:$0xff]
        %v1391 = vld [vmem:[%s1375 + $0x80] sm:$0xff]
        %v1392 = vld [vmem:[%s1375 + $0x90] sm:$0xff]
        %v1393 = vld [vmem:[%s1375 + $0x98] sm:$0xff]
        %v1394 = vld [vmem:[%s1375 + $0xa0] sm:$0xff]
        %v1395 = vld [vmem:[%s1375 + $0xa8] sm:$0xff]
        %v1396 = vld [vmem:[%s1375 + $0xb0] sm:$0xff]
        %v1397 = vld [vmem:[%s1375 + $0xb8] sm:$0xff]
        %v1398 = vld [vmem:[%s1375 + $0xc0] sm:$0xff]
        %v1399 = vld [vmem:[%s1375 + $0xc8] sm:$0xff]
        %v1400 = vld [vmem:[%s1375 + $0x1] sm:$0xff]
        %v1401 = vld [vmem:[%s1375 + $0x9] sm:$0xff]
        %v1402 = vld [vmem:[%s1375 + $0x11] sm:$0xff]
        %v1403 = vld [vmem:[%s1375 + $0x19] sm:$0xff]
        %v1404 = vld [vmem:[%s1375 + $0x21] sm:$0xff]
        %v1405 = vld [vmem:[%s1375 + $0x29] sm:$0xff]
        %v1406 = vld [vmem:[%s1375 + $0x31] sm:$0xff]
        %v1407 = vld [vmem:[%s1375 + $0x39] sm:$0xff]
        %v1408 = vld [vmem:[%s1375 + $0x49] sm:$0xff]
        %v1409 = vld [vmem:[%s1375 + $0x51] sm:$0xff]
        %v1410 = vld [vmem:[%s1375 + $0x59] sm:$0xff]
        %v1411 = vld [vmem:[%s1375 + $0x61] sm:$0xff]
        %v1412 = vld [vmem:[%s1375 + $0x69] sm:$0xff]
        %v1413 = vld [vmem:[%s1375 + $0x71] sm:$0xff]
        %v1414 = vld [vmem:[%s1375 + $0x79] sm:$0xff]
        %v1415 = vld [vmem:[%s1375 + $0x81] sm:$0xff]
        %v1416 = vld [vmem:[%s1375 + $0x91] sm:$0xff]
        %v1417 = vld [vmem:[%s1375 + $0x99] sm:$0xff]
        %v1418 = vld [vmem:[%s1375 + $0xa1] sm:$0xff]
        %v1419 = vld [vmem:[%s1375 + $0xa9] sm:$0xff]
        %v1420 = vld [vmem:[%s1375 + $0xb1] sm:$0xff]
        %v1421 = vld [vmem:[%s1375 + $0xb9] sm:$0xff]
        %v1422 = vld [vmem:[%s1375 + $0xc1] sm:$0xff]
        %v1423 = vld [vmem:[%s1375 + $0xc9] sm:$0xff]
        %v1424 = vadd.f32 %v1376, %v1400
        %v1425 = vadd.f32 %v1377, %v1401
        %v1426 = vadd.f32 %v1378, %v1402
        %v1427 = vadd.f32 %v1379, %v1403
        %v1428 = vadd.f32 %v1380, %v1404
        %v1429 = vadd.f32 %v1381, %v1405
        %v1430 = vadd.f32 %v1382, %v1406
        %v1431 = vadd.f32 %v1383, %v1407
        %v1432 = vadd.f32 %v1384, %v1408
        %v1433 = vadd.f32 %v1385, %v1409
        %v1434 = vadd.f32 %v1386, %v1410
        %v1435 = vadd.f32 %v1387, %v1411
        %v1436 = vadd.f32 %v1388, %v1412
        %v1437 = vadd.f32 %v1389, %v1413
        %v1438 = vadd.f32 %v1390, %v1414
        %v1439 = vadd.f32 %v1391, %v1415
        %v1440 = vadd.f32 %v1392, %v1416
        %v1441 = vadd.f32 %v1393, %v1417
        %v1442 = vadd.f32 %v1394, %v1418
        %v1443 = vadd.f32 %v1395, %v1419
        %v1444 = vadd.f32 %v1396, %v1420
        %v1445 = vadd.f32 %v1397, %v1421
        %v1446 = vadd.f32 %v1398, %v1422
        %v1447 = vadd.f32 %v1399, %v1423
        %v1448 = vmul.f32 %v1424, 0.25
        %v1449 = vmul.f32 %v1425, 0.25
        %v1450 = vmul.f32 %v1426, 0.25
        %v1451 = vmul.f32 %v1427, 0.25
        %v1452 = vmul.f32 %v1428, 0.25
        %v1453 = vmul.f32 %v1429, 0.25
        %v1454 = vmul.f32 %v1430, 0.25
        %v1455 = vmul.f32 %v1431, 0.25
        %v1456 = vmul.f32 %v1432, 0.25
        %v1457 = vmul.f32 %v1433, 0.25
        %v1458 = vmul.f32 %v1434, 0.25
        %v1459 = vmul.f32 %v1435, 0.25
        %v1460 = vmul.f32 %v1436, 0.25
        %v1461 = vmul.f32 %v1437, 0.25
        %v1462 = vmul.f32 %v1438, 0.25
        %v1463 = vmul.f32 %v1439, 0.25
        %v1464 = vmul.f32 %v1440, 0.25
        %v1465 = vmul.f32 %v1441, 0.25
        %v1466 = vmul.f32 %v1442, 0.25
        %v1467 = vmul.f32 %v1443, 0.25
        %v1468 = vmul.f32 %v1444, 0.25
        %v1469 = vmul.f32 %v1445, 0.25
        %v1470 = vmul.f32 %v1446, 0.25
        %v1471 = vmul.f32 %v1447, 0.25
        %1496 = vrot.lane.b32.xlu0 %v1448, 126
        %v1497 = vpop.permute.xlu0 %1496
        %1498 = vrot.lane.b32.xlu0 %v1449, 126
        %v1499 = vpop.permute.xlu0 %1498
        %1500 = vrot.lane.b32.xlu0 %v1450, 126
        %v1501 = vpop.permute.xlu0 %1500
        %1502 = vrot.lane.b32.xlu0 %v1451, 126
        %v1503 = vpop.permute.xlu0 %1502
        %1504 = vrot.lane.b32.xlu0 %v1452, 126
        %v1505 = vpop.permute.xlu0 %1504
        %1506 = vrot.lane.b32.xlu0 %v1453, 126
        %v1507 = vpop.permute.xlu0 %1506
        %1508 = vrot.lane.b32.xlu0 %v1454, 126
        %v1509 = vpop.permute.xlu0 %1508
        %1510 = vrot.lane.b32.xlu0 %v1455, 126
        %v1511 = vpop.permute.xlu0 %1510
        %1512 = vrot.lane.b32.xlu0 %v1456, 126
        %v1513 = vpop.permute.xlu0 %1512
        %1514 = vrot.lane.b32.xlu0 %v1457, 126
        %v1515 = vpop.permute.xlu0 %1514
        %1516 = vrot.lane.b32.xlu0 %v1458, 126
        %v1517 = vpop.permute.xlu0 %1516
        %1518 = vrot.lane.b32.xlu0 %v1459, 126
        %v1519 = vpop.permute.xlu0 %1518
        %1520 = vrot.lane.b32.xlu0 %v1460, 126
        %v1521 = vpop.permute.xlu0 %1520
        %1522 = vrot.lane.b32.xlu0 %v1461, 126
        %v1523 = vpop.permute.xlu0 %1522
        %1524 = vrot.lane.b32.xlu0 %v1462, 126
        %v1525 = vpop.permute.xlu0 %1524
        %1526 = vrot.lane.b32.xlu0 %v1463, 126
        %v1527 = vpop.permute.xlu0 %1526
        %1528 = vrot.lane.b32.xlu0 %v1464, 126
        %v1529 = vpop.permute.xlu0 %1528
        %1530 = vrot.lane.b32.xlu0 %v1465, 126
        %v1531 = vpop.permute.xlu0 %1530
        %1532 = vrot.lane.b32.xlu0 %v1466, 126
        %v1533 = vpop.permute.xlu0 %1532
        %1534 = vrot.lane.b32.xlu0 %v1467, 126
        %v1535 = vpop.permute.xlu0 %1534
        %1536 = vrot.lane.b32.xlu0 %v1468, 126
        %v1537 = vpop.permute.xlu0 %1536
        %1538 = vrot.lane.b32.xlu0 %v1469, 126
        %v1539 = vpop.permute.xlu0 %1538
        %1540 = vrot.lane.b32.xlu0 %v1470, 126
        %v1541 = vpop.permute.xlu0 %1540
        %1542 = vrot.lane.b32.xlu0 %v1471, 126
        %v1543 = vpop.permute.xlu0 %1542
        %v1568 = vadd.f32 %v1448, %v1497
        %v1569 = vadd.f32 %v1449, %v1499
        %v1570 = vadd.f32 %v1450, %v1501
        %v1571 = vadd.f32 %v1451, %v1503
        %v1572 = vadd.f32 %v1452, %v1505
        %v1573 = vadd.f32 %v1453, %v1507
        %v1574 = vadd.f32 %v1454, %v1509
        %v1575 = vadd.f32 %v1455, %v1511
        %v1576 = vadd.f32 %v1456, %v1513
        %v1577 = vadd.f32 %v1457, %v1515
        %v1578 = vadd.f32 %v1458, %v1517
        %v1579 = vadd.f32 %v1459, %v1519
        %v1580 = vadd.f32 %v1460, %v1521
        %v1581 = vadd.f32 %v1461, %v1523
        %v1582 = vadd.f32 %v1462, %v1525
        %v1583 = vadd.f32 %v1463, %v1527
        %v1584 = vadd.f32 %v1464, %v1529
        %v1585 = vadd.f32 %v1465, %v1531
        %v1586 = vadd.f32 %v1466, %v1533
        %v1587 = vadd.f32 %v1467, %v1535
        %v1588 = vadd.f32 %v1468, %v1537
        %v1589 = vadd.f32 %v1469, %v1539
        %v1590 = vadd.f32 %v1470, %v1541
        %v1591 = vadd.f32 %v1471, %v1543
        %v1592 = vmul.f32 %v1568, 0.0625
        %v1593 = vmul.f32 %v1569, 0.0625
        %v1594 = vmul.f32 %v1570, 0.0625
        %v1595 = vmul.f32 %v1571, 0.0625
        %v1596 = vmul.f32 %v1572, 0.0625
        %v1597 = vmul.f32 %v1573, 0.0625
        %v1598 = vmul.f32 %v1574, 0.0625
        %v1599 = vmul.f32 %v1575, 0.0625
        %v1600 = vmul.f32 %v1576, 0.0625
        %v1601 = vmul.f32 %v1577, 0.0625
        %v1602 = vmul.f32 %v1578, 0.0625
        %v1603 = vmul.f32 %v1579, 0.0625
        %v1604 = vmul.f32 %v1580, 0.0625
        %v1605 = vmul.f32 %v1581, 0.0625
        %v1606 = vmul.f32 %v1582, 0.0625
        %v1607 = vmul.f32 %v1583, 0.0625
        %v1608 = vmul.f32 %v1584, 0.0625
        %v1609 = vmul.f32 %v1585, 0.0625
        %v1610 = vmul.f32 %v1586, 0.0625
        %v1611 = vmul.f32 %v1587, 0.0625
        %v1612 = vmul.f32 %v1588, 0.0625
        %v1613 = vmul.f32 %v1589, 0.0625
        %v1614 = vmul.f32 %v1590, 0.0625
        %v1615 = vmul.f32 %v1591, 0.0625
        %v1616 = vmul.f32 %v1448, 0.375
        %v1617 = vmul.f32 %v1449, 0.375
        %v1618 = vmul.f32 %v1450, 0.375
        %v1619 = vmul.f32 %v1451, 0.375
        %v1620 = vmul.f32 %v1452, 0.375
        %v1621 = vmul.f32 %v1453, 0.375
        %v1622 = vmul.f32 %v1454, 0.375
        %v1623 = vmul.f32 %v1455, 0.375
        %v1624 = vmul.f32 %v1456, 0.375
        %v1625 = vmul.f32 %v1457, 0.375
        %v1626 = vmul.f32 %v1458, 0.375
        %v1627 = vmul.f32 %v1459, 0.375
        %v1628 = vmul.f32 %v1460, 0.375
        %v1629 = vmul.f32 %v1461, 0.375
        %v1630 = vmul.f32 %v1462, 0.375
        %v1631 = vmul.f32 %v1463, 0.375
        %v1632 = vmul.f32 %v1464, 0.375
        %v1633 = vmul.f32 %v1465, 0.375
        %v1634 = vmul.f32 %v1466, 0.375
        %v1635 = vmul.f32 %v1467, 0.375
        %v1636 = vmul.f32 %v1468, 0.375
        %v1637 = vmul.f32 %v1469, 0.375
        %v1638 = vmul.f32 %v1470, 0.375
        %v1639 = vmul.f32 %v1471, 0.375
        %1664 = vrot.lane.b32.xlu0 %v1616, 127
        %v1665 = vpop.permute.xlu0 %1664
        %1666 = vrot.lane.b32.xlu0 %v1617, 127
        %v1667 = vpop.permute.xlu0 %1666
        %1668 = vrot.lane.b32.xlu0 %v1618, 127
        %v1669 = vpop.permute.xlu0 %1668
        %1670 = vrot.lane.b32.xlu0 %v1619, 127
        %v1671 = vpop.permute.xlu0 %1670
        %1672 = vrot.lane.b32.xlu0 %v1620, 127
        %v1673 = vpop.permute.xlu0 %1672
        %1674 = vrot.lane.b32.xlu0 %v1621, 127
        %v1675 = vpop.permute.xlu0 %1674
        %1676 = vrot.lane.b32.xlu0 %v1622, 127
        %v1677 = vpop.permute.xlu0 %1676
        %1678 = vrot.lane.b32.xlu0 %v1623, 127
        %v1679 = vpop.permute.xlu0 %1678
        %1680 = vrot.lane.b32.xlu0 %v1624, 127
        %v1681 = vpop.permute.xlu0 %1680
        %1682 = vrot.lane.b32.xlu0 %v1625, 127
        %v1683 = vpop.permute.xlu0 %1682
        %1684 = vrot.lane.b32.xlu0 %v1626, 127
        %v1685 = vpop.permute.xlu0 %1684
        %1686 = vrot.lane.b32.xlu0 %v1627, 127
        %v1687 = vpop.permute.xlu0 %1686
        %1688 = vrot.lane.b32.xlu0 %v1628, 127
        %v1689 = vpop.permute.xlu0 %1688
        %1690 = vrot.lane.b32.xlu0 %v1629, 127
        %v1691 = vpop.permute.xlu0 %1690
        %1692 = vrot.lane.b32.xlu0 %v1630, 127
        %v1693 = vpop.permute.xlu0 %1692
        %1694 = vrot.lane.b32.xlu0 %v1631, 127
        %v1695 = vpop.permute.xlu0 %1694
        %1696 = vrot.lane.b32.xlu0 %v1632, 127
        %v1697 = vpop.permute.xlu0 %1696
        %1698 = vrot.lane.b32.xlu0 %v1633, 127
        %v1699 = vpop.permute.xlu0 %1698
        %1700 = vrot.lane.b32.xlu0 %v1634, 127
        %v1701 = vpop.permute.xlu0 %1700
        %1702 = vrot.lane.b32.xlu0 %v1635, 127
        %v1703 = vpop.permute.xlu0 %1702
        %1704 = vrot.lane.b32.xlu0 %v1636, 127
        %v1705 = vpop.permute.xlu0 %1704
        %1706 = vrot.lane.b32.xlu0 %v1637, 127
        %v1707 = vpop.permute.xlu0 %1706
        %1708 = vrot.lane.b32.xlu0 %v1638, 127
        %v1709 = vpop.permute.xlu0 %1708
        %1710 = vrot.lane.b32.xlu0 %v1639, 127
        %v1711 = vpop.permute.xlu0 %1710
        %v1736 = vadd.f32 %v1592, %v1665
        %v1737 = vadd.f32 %v1593, %v1667
        %v1738 = vadd.f32 %v1594, %v1669
        %v1739 = vadd.f32 %v1595, %v1671
        %v1740 = vadd.f32 %v1596, %v1673
        %v1741 = vadd.f32 %v1597, %v1675
        %v1742 = vadd.f32 %v1598, %v1677
        %v1743 = vadd.f32 %v1599, %v1679
        %v1744 = vadd.f32 %v1600, %v1681
        %v1745 = vadd.f32 %v1601, %v1683
        %v1746 = vadd.f32 %v1602, %v1685
        %v1747 = vadd.f32 %v1603, %v1687
        %v1748 = vadd.f32 %v1604, %v1689
        %v1749 = vadd.f32 %v1605, %v1691
        %v1750 = vadd.f32 %v1606, %v1693
        %v1751 = vadd.f32 %v1607, %v1695
        %v1752 = vadd.f32 %v1608, %v1697
        %v1753 = vadd.f32 %v1609, %v1699
        %v1754 = vadd.f32 %v1610, %v1701
        %v1755 = vadd.f32 %v1611, %v1703
        %v1756 = vadd.f32 %v1612, %v1705
        %v1757 = vadd.f32 %v1613, %v1707
        %v1758 = vadd.f32 %v1614, %v1709
        %v1759 = vadd.f32 %v1615, %v1711
        %v1760 = vadd.f32 %v1351, %v1736
        %v1761 = vadd.f32 %v1352, %v1737
        %v1762 = vadd.f32 %v1353, %v1738
        %v1763 = vadd.f32 %v1354, %v1739
        %v1764 = vadd.f32 %v1355, %v1740
        %v1765 = vadd.f32 %v1356, %v1741
        %v1766 = vadd.f32 %v1357, %v1742
        %v1767 = vadd.f32 %v1358, %v1743
        %v1768 = vadd.f32 %v1359, %v1744
        %v1769 = vadd.f32 %v1360, %v1745
        %v1770 = vadd.f32 %v1361, %v1746
        %v1771 = vadd.f32 %v1362, %v1747
        %v1772 = vadd.f32 %v1363, %v1748
        %v1773 = vadd.f32 %v1364, %v1749
        %v1774 = vadd.f32 %v1365, %v1750
        %v1775 = vadd.f32 %v1366, %v1751
        %v1776 = vadd.f32 %v1367, %v1752
        %v1777 = vadd.f32 %v1368, %v1753
        %v1778 = vadd.f32 %v1369, %v1754
        %v1779 = vadd.f32 %v1370, %v1755
        %v1780 = vadd.f32 %v1371, %v1756
        %v1781 = vadd.f32 %v1372, %v1757
        %v1782 = vadd.f32 %v1373, %v1758
        %v1783 = vadd.f32 %v1374, %v1759
        %s1784 = scalar_lea.vmem %s563, 648 [#allocation2]
        %v1785 = vld [vmem:[%s1784] sm:$0xff]
        %v1786 = vld [vmem:[%s1784 + $0x8] sm:$0xff]
        %v1787 = vld [vmem:[%s1784 + $0x10] sm:$0xff]
        %v1788 = vld [vmem:[%s1784 + $0x18] sm:$0xff]
        %v1789 = vld [vmem:[%s1784 + $0x20] sm:$0xff]
        %v1790 = vld [vmem:[%s1784 + $0x28] sm:$0xff]
        %v1791 = vld [vmem:[%s1784 + $0x30] sm:$0xff]
        %v1792 = vld [vmem:[%s1784 + $0x38] sm:$0xff]
        %v1793 = vld [vmem:[%s1784 + $0x48] sm:$0xff]
        %v1794 = vld [vmem:[%s1784 + $0x50] sm:$0xff]
        %v1795 = vld [vmem:[%s1784 + $0x58] sm:$0xff]
        %v1796 = vld [vmem:[%s1784 + $0x60] sm:$0xff]
        %v1797 = vld [vmem:[%s1784 + $0x68] sm:$0xff]
        %v1798 = vld [vmem:[%s1784 + $0x70] sm:$0xff]
        %v1799 = vld [vmem:[%s1784 + $0x78] sm:$0xff]
        %v1800 = vld [vmem:[%s1784 + $0x80] sm:$0xff]
        %v1801 = vld [vmem:[%s1784 + $0x90] sm:$0xff]
        %v1802 = vld [vmem:[%s1784 + $0x98] sm:$0xff]
        %v1803 = vld [vmem:[%s1784 + $0xa0] sm:$0xff]
        %v1804 = vld [vmem:[%s1784 + $0xa8] sm:$0xff]
        %v1805 = vld [vmem:[%s1784 + $0xb0] sm:$0xff]
        %v1806 = vld [vmem:[%s1784 + $0xb8] sm:$0xff]
        %v1807 = vld [vmem:[%s1784 + $0xc0] sm:$0xff]
        %v1808 = vld [vmem:[%s1784 + $0xc8] sm:$0xff]
        %v1809 = vld [vmem:[%s1784 + $0x1] sm:$0xff]
        %v1810 = vld [vmem:[%s1784 + $0x9] sm:$0xff]
        %v1811 = vld [vmem:[%s1784 + $0x11] sm:$0xff]
        %v1812 = vld [vmem:[%s1784 + $0x19] sm:$0xff]
        %v1813 = vld [vmem:[%s1784 + $0x21] sm:$0xff]
        %v1814 = vld [vmem:[%s1784 + $0x29] sm:$0xff]
        %v1815 = vld [vmem:[%s1784 + $0x31] sm:$0xff]
        %v1816 = vld [vmem:[%s1784 + $0x39] sm:$0xff]
        %v1817 = vld [vmem:[%s1784 + $0x49] sm:$0xff]
        %v1818 = vld [vmem:[%s1784 + $0x51] sm:$0xff]
        %v1819 = vld [vmem:[%s1784 + $0x59] sm:$0xff]
        %v1820 = vld [vmem:[%s1784 + $0x61] sm:$0xff]
        %v1821 = vld [vmem:[%s1784 + $0x69] sm:$0xff]
        %v1822 = vld [vmem:[%s1784 + $0x71] sm:$0xff]
        %v1823 = vld [vmem:[%s1784 + $0x79] sm:$0xff]
        %v1824 = vld [vmem:[%s1784 + $0x81] sm:$0xff]
        %v1825 = vld [vmem:[%s1784 + $0x91] sm:$0xff]
        %v1826 = vld [vmem:[%s1784 + $0x99] sm:$0xff]
        %v1827 = vld [vmem:[%s1784 + $0xa1] sm:$0xff]
        %v1828 = vld [vmem:[%s1784 + $0xa9] sm:$0xff]
        %v1829 = vld [vmem:[%s1784 + $0xb1] sm:$0xff]
        %v1830 = vld [vmem:[%s1784 + $0xb9] sm:$0xff]
        %v1831 = vld [vmem:[%s1784 + $0xc1] sm:$0xff]
        %v1832 = vld [vmem:[%s1784 + $0xc9] sm:$0xff]
        %v1833 = vadd.f32 %v1785, %v1809
        %v1834 = vadd.f32 %v1786, %v1810
        %v1835 = vadd.f32 %v1787, %v1811
        %v1836 = vadd.f32 %v1788, %v1812
        %v1837 = vadd.f32 %v1789, %v1813
        %v1838 = vadd.f32 %v1790, %v1814
        %v1839 = vadd.f32 %v1791, %v1815
        %v1840 = vadd.f32 %v1792, %v1816
        %v1841 = vadd.f32 %v1793, %v1817
        %v1842 = vadd.f32 %v1794, %v1818
        %v1843 = vadd.f32 %v1795, %v1819
        %v1844 = vadd.f32 %v1796, %v1820
        %v1845 = vadd.f32 %v1797, %v1821
        %v1846 = vadd.f32 %v1798, %v1822
        %v1847 = vadd.f32 %v1799, %v1823
        %v1848 = vadd.f32 %v1800, %v1824
        %v1849 = vadd.f32 %v1801, %v1825
        %v1850 = vadd.f32 %v1802, %v1826
        %v1851 = vadd.f32 %v1803, %v1827
        %v1852 = vadd.f32 %v1804, %v1828
        %v1853 = vadd.f32 %v1805, %v1829
        %v1854 = vadd.f32 %v1806, %v1830
        %v1855 = vadd.f32 %v1807, %v1831
        %v1856 = vadd.f32 %v1808, %v1832
        %v1857 = vmul.f32 %v1833, 0.25
        %v1858 = vmul.f32 %v1834, 0.25
        %v1859 = vmul.f32 %v1835, 0.25
        %v1860 = vmul.f32 %v1836, 0.25
        %v1861 = vmul.f32 %v1837, 0.25
        %v1862 = vmul.f32 %v1838, 0.25
        %v1863 = vmul.f32 %v1839, 0.25
        %v1864 = vmul.f32 %v1840, 0.25
        %v1865 = vmul.f32 %v1841, 0.25
        %v1866 = vmul.f32 %v1842, 0.25
        %v1867 = vmul.f32 %v1843, 0.25
        %v1868 = vmul.f32 %v1844, 0.25
        %v1869 = vmul.f32 %v1845, 0.25
        %v1870 = vmul.f32 %v1846, 0.25
        %v1871 = vmul.f32 %v1847, 0.25
        %v1872 = vmul.f32 %v1848, 0.25
        %v1873 = vmul.f32 %v1849, 0.25
        %v1874 = vmul.f32 %v1850, 0.25
        %v1875 = vmul.f32 %v1851, 0.25
        %v1876 = vmul.f32 %v1852, 0.25
        %v1877 = vmul.f32 %v1853, 0.25
        %v1878 = vmul.f32 %v1854, 0.25
        %v1879 = vmul.f32 %v1855, 0.25
        %v1880 = vmul.f32 %v1856, 0.25
        %1905 = vrot.lane.b32.xlu0 %v1857, 127
        %v1906 = vpop.permute.xlu0 %1905
        %1907 = vrot.lane.b32.xlu0 %v1858, 127
        %v1908 = vpop.permute.xlu0 %1907
        %1909 = vrot.lane.b32.xlu0 %v1859, 127
        %v1910 = vpop.permute.xlu0 %1909
        %1911 = vrot.lane.b32.xlu0 %v1860, 127
        %v1912 = vpop.permute.xlu0 %1911
        %1913 = vrot.lane.b32.xlu0 %v1861, 127
        %v1914 = vpop.permute.xlu0 %1913
        %1915 = vrot.lane.b32.xlu0 %v1862, 127
        %v1916 = vpop.permute.xlu0 %1915
        %1917 = vrot.lane.b32.xlu0 %v1863, 127
        %v1918 = vpop.permute.xlu0 %1917
        %1919 = vrot.lane.b32.xlu0 %v1864, 127
        %v1920 = vpop.permute.xlu0 %1919
        %1921 = vrot.lane.b32.xlu0 %v1865, 127
        %v1922 = vpop.permute.xlu0 %1921
        %1923 = vrot.lane.b32.xlu0 %v1866, 127
        %v1924 = vpop.permute.xlu0 %1923
        %1925 = vrot.lane.b32.xlu0 %v1867, 127
        %v1926 = vpop.permute.xlu0 %1925
        %1927 = vrot.lane.b32.xlu0 %v1868, 127
        %v1928 = vpop.permute.xlu0 %1927
        %1929 = vrot.lane.b32.xlu0 %v1869, 127
        %v1930 = vpop.permute.xlu0 %1929
        %1931 = vrot.lane.b32.xlu0 %v1870, 127
        %v1932 = vpop.permute.xlu0 %1931
        %1933 = vrot.lane.b32.xlu0 %v1871, 127
        %v1934 = vpop.permute.xlu0 %1933
        %1935 = vrot.lane.b32.xlu0 %v1872, 127
        %v1936 = vpop.permute.xlu0 %1935
        %1937 = vrot.lane.b32.xlu0 %v1873, 127
        %v1938 = vpop.permute.xlu0 %1937
        %1939 = vrot.lane.b32.xlu0 %v1874, 127
        %v1940 = vpop.permute.xlu0 %1939
        %1941 = vrot.lane.b32.xlu0 %v1875, 127
        %v1942 = vpop.permute.xlu0 %1941
        %1943 = vrot.lane.b32.xlu0 %v1876, 127
        %v1944 = vpop.permute.xlu0 %1943
        %1945 = vrot.lane.b32.xlu0 %v1877, 127
        %v1946 = vpop.permute.xlu0 %1945
        %1947 = vrot.lane.b32.xlu0 %v1878, 127
        %v1948 = vpop.permute.xlu0 %1947
        %1949 = vrot.lane.b32.xlu0 %v1879, 127
        %v1950 = vpop.permute.xlu0 %1949
        %1951 = vrot.lane.b32.xlu0 %v1880, 127
        %v1952 = vpop.permute.xlu0 %1951
        %v1977 = vadd.f32 %v1857, %v1906
        %v1978 = vadd.f32 %v1858, %v1908
        %v1979 = vadd.f32 %v1859, %v1910
        %v1980 = vadd.f32 %v1860, %v1912
        %v1981 = vadd.f32 %v1861, %v1914
        %v1982 = vadd.f32 %v1862, %v1916
        %v1983 = vadd.f32 %v1863, %v1918
        %v1984 = vadd.f32 %v1864, %v1920
        %v1985 = vadd.f32 %v1865, %v1922
        %v1986 = vadd.f32 %v1866, %v1924
        %v1987 = vadd.f32 %v1867, %v1926
        %v1988 = vadd.f32 %v1868, %v1928
        %v1989 = vadd.f32 %v1869, %v1930
        %v1990 = vadd.f32 %v1870, %v1932
        %v1991 = vadd.f32 %v1871, %v1934
        %v1992 = vadd.f32 %v1872, %v1936
        %v1993 = vadd.f32 %v1873, %v1938
        %v1994 = vadd.f32 %v1874, %v1940
        %v1995 = vadd.f32 %v1875, %v1942
        %v1996 = vadd.f32 %v1876, %v1944
        %v1997 = vadd.f32 %v1877, %v1946
        %v1998 = vadd.f32 %v1878, %v1948
        %v1999 = vadd.f32 %v1879, %v1950
        %v2000 = vadd.f32 %v1880, %v1952
        %v2001 = vmul.f32 %v1977, 0.25
        %v2002 = vmul.f32 %v1978, 0.25
        %v2003 = vmul.f32 %v1979, 0.25
        %v2004 = vmul.f32 %v1980, 0.25
        %v2005 = vmul.f32 %v1981, 0.25
        %v2006 = vmul.f32 %v1982, 0.25
        %v2007 = vmul.f32 %v1983, 0.25
        %v2008 = vmul.f32 %v1984, 0.25
        %v2009 = vmul.f32 %v1985, 0.25
        %v2010 = vmul.f32 %v1986, 0.25
        %v2011 = vmul.f32 %v1987, 0.25
        %v2012 = vmul.f32 %v1988, 0.25
        %v2013 = vmul.f32 %v1989, 0.25
        %v2014 = vmul.f32 %v1990, 0.25
        %v2015 = vmul.f32 %v1991, 0.25
        %v2016 = vmul.f32 %v1992, 0.25
        %v2017 = vmul.f32 %v1993, 0.25
        %v2018 = vmul.f32 %v1994, 0.25
        %v2019 = vmul.f32 %v1995, 0.25
        %v2020 = vmul.f32 %v1996, 0.25
        %v2021 = vmul.f32 %v1997, 0.25
        %v2022 = vmul.f32 %v1998, 0.25
        %v2023 = vmul.f32 %v1999, 0.25
        %v2024 = vmul.f32 %v2000, 0.25
        %v2025 = vadd.f32 %v1760, %v2001
        %v2026 = vadd.f32 %v1761, %v2002
        %v2027 = vadd.f32 %v1762, %v2003
        %v2028 = vadd.f32 %v1763, %v2004
        %v2029 = vadd.f32 %v1764, %v2005
        %v2030 = vadd.f32 %v1765, %v2006
        %v2031 = vadd.f32 %v1766, %v2007
        %v2032 = vadd.f32 %v1767, %v2008
        %v2033 = vadd.f32 %v1768, %v2009
        %v2034 = vadd.f32 %v1769, %v2010
        %v2035 = vadd.f32 %v1770, %v2011
        %v2036 = vadd.f32 %v1771, %v2012
        %v2037 = vadd.f32 %v1772, %v2013
        %v2038 = vadd.f32 %v1773, %v2014
        %v2039 = vadd.f32 %v1774, %v2015
        %v2040 = vadd.f32 %v1775, %v2016
        %v2041 = vadd.f32 %v1776, %v2017
        %v2042 = vadd.f32 %v1777, %v2018
        %v2043 = vadd.f32 %v1778, %v2019
        %v2044 = vadd.f32 %v1779, %v2020
        %v2045 = vadd.f32 %v1780, %v2021
        %v2046 = vadd.f32 %v1781, %v2022
        %v2047 = vadd.f32 %v1782, %v2023
        %v2048 = vadd.f32 %v1783, %v2024
        %vm2049 = vcmask 523264
        %2050 = vst.msk [vmem:[%s579] sm:$0xff] %vm2049, %v2025
        %2051 = vst.msk [vmem:[%s579 + $0x8] sm:$0xff] %vm2049, %v2026
        %2052 = vst.msk [vmem:[%s579 + $0x10] sm:$0xff] %vm2049, %v2027
        %2053 = vst.msk [vmem:[%s579 + $0x18] sm:$0xff] %vm2049, %v2028
        %2054 = vst.msk [vmem:[%s579 + $0x20] sm:$0xff] %vm2049, %v2029
        %2055 = vst.msk [vmem:[%s579 + $0x28] sm:$0xff] %vm2049, %v2030
        %2056 = vst.msk [vmem:[%s579 + $0x30] sm:$0xff] %vm2049, %v2031
        %2057 = vst.msk [vmem:[%s579 + $0x38] sm:$0xff] %vm2049, %v2032
        %2058 = vst.msk [vmem:[%s579 + $0x40] sm:$0xff] %vm2049, %v2033
        %2059 = vst.msk [vmem:[%s579 + $0x48] sm:$0xff] %vm2049, %v2034
        %2060 = vst.msk [vmem:[%s579 + $0x50] sm:$0xff] %vm2049, %v2035
        %2061 = vst.msk [vmem:[%s579 + $0x58] sm:$0xff] %vm2049, %v2036
        %2062 = vst.msk [vmem:[%s579 + $0x60] sm:$0xff] %vm2049, %v2037
        %2063 = vst.msk [vmem:[%s579 + $0x68] sm:$0xff] %vm2049, %v2038
        %2064 = vst.msk [vmem:[%s579 + $0x70] sm:$0xff] %vm2049, %v2039
        %2065 = vst.msk [vmem:[%s579 + $0x78] sm:$0xff] %vm2049, %v2040
        %2066 = vst.msk [vmem:[%s579 + $0x80] sm:$0xff] %vm2049, %v2041
        %2067 = vst.msk [vmem:[%s579 + $0x88] sm:$0xff] %vm2049, %v2042
        %2068 = vst.msk [vmem:[%s579 + $0x90] sm:$0xff] %vm2049, %v2043
        %2069 = vst.msk [vmem:[%s579 + $0x98] sm:$0xff] %vm2049, %v2044
        %2070 = vst.msk [vmem:[%s579 + $0xa0] sm:$0xff] %vm2049, %v2045
        %2071 = vst.msk [vmem:[%s579 + $0xa8] sm:$0xff] %vm2049, %v2046
        %2072 = vst.msk [vmem:[%s579 + $0xb0] sm:$0xff] %vm2049, %v2047
        %2073 = vst.msk [vmem:[%s579 + $0xb8] sm:$0xff] %vm2049, %v2048
        %s2074 = sand.u32 %s49, 1
        %s2075 = scalar_lea.sflag [#allocation4], %s2074
        %s2076 = sand.u32 %s49, 1
        %s2077 = smul.addr %s2076, 192
        %s2078 = scalar_lea.vmem [#allocation3], %s2077
        // Predicated region
        $region63: #{tpu_custom_call.1} parent=57 // pred_check
          %p2079 = pneg %p59
        $region64: #{tpu_custom_call.1} parent=57 // pred_check_branch
          %2081 = sbr.rel (%p2079) target = $region66
        $region65: #{tpu_custom_call.1} parent=57 // pred_region
          %s2082 = smul.u32 3, %s15
          %2084 = vsyncadd %s2075, 0
          %s2085 = smul.addr %s2082, 8
          %s2086 = smul.addr %s2085, 8
          %s2087 = scalar_lea.hbm %s1, %s2086
          %s2088 = sshll.u32 %s2078, 4
          %s2089 = int_to_ptr.vmem [resolvable:$true] %s2088
          %s2090 = sshll.u32 %s2087, 4
          %s2091 = int_to_ptr.hbm [resolvable:$true] %s2090
          %2096 = dma.vmem_to_hbm [thread:$0]  %s2089, 3072, %s2091, %s2075, 128, 128, 8
        $region66: #{tpu_custom_call.1} parent=57 // pred_fallthru
          _
      $region58: #{tpu_custom_call.1} parent=5 // pred_fallthru
        _
      %p2097 = scmp.le.s32.totalorder 2, %s10
      // Predicated region
      $region67: #{tpu_custom_call.1} parent=5 // pred_check
        %p2098 = pneg %p2097
      $region68: #{tpu_custom_call.1} parent=5 // pred_check_branch
        %2100 = sbr.rel (%p2098) target = $region70
      $region69: #{tpu_custom_call.1} parent=5 // pred_region
        %s2101 = ssub.s32 %s10, 2
        // Predicated region
        $region71: #{tpu_custom_call.1} parent=69 // pred_check
          %p2102 = pneg %p65
        $region72: #{tpu_custom_call.1} parent=69 // pred_check_branch
          %2104 = sbr.rel (%p2102) target = $region74
        $region73: #{tpu_custom_call.1} parent=69 // pred_region
          %s2105 = sand.u32 %s50, 1
          %s2106 = scalar_lea.sflag [#allocation4], %s2105
          %s2107 = sand.u32 %s50, 1
          %s2108 = smul.addr %s2107, 192
          %s2109 = scalar_lea.vmem [#allocation3], %s2108
          %2111 = dma.done %s2106, 3072
        $region74: #{tpu_custom_call.1} parent=69 // pred_fallthru
          _
      $region70: #{tpu_custom_call.1} parent=5 // pred_fallthru
        _
    $region6: #{tpu_custom_call.1} parent=1 // loop_footer
      %s14 = sadd.s32 1, %s10
    $region7: #{tpu_custom_call.1} parent=1 // loop_footer_branch
      %9 = sbr.rel target = $region3
    $region8: #{tpu_custom_call.1} parent=1 // loop_exit
      _
    %2112 = vsyncpa [#allocation4], 1
    %s2113 = scalar_lea.sflag [#allocation4], 1
    %2114 = vsyncpa %s2113, 1

</llo_original>
